<compile_context>
chip_gen: v6e
topology: v6e:2x2x1
jax: 0.10.0
libtpu: 0.0.40
codegen_flags: <defaults>
</compile_context>

<pallas_src>
import functools

import jax
import jax.numpy as jnp
from jax.experimental import pallas as pl
from jax.experimental.pallas import tpu as pltpu


# ----------------------------------------------------------------------------
# Fused Pallas kernel: LSTM layer 1 + LSTM layer 2 (wavefronted) + Linear(H, 1)
# ----------------------------------------------------------------------------
def light_lstm_kernel(x_ref, wih1_ref, whh1_ref, b1_ref, w2_ref, b2_ref,
                      wfc_ref, bfc_ref, out_ref, *, T, Bp, H):
    """
    x_ref:    (T*Bp, D)  time-major input, batch padded to Bp (mult. of 8), f32
    wih1_ref: (D, 4H)    layer-1 input weights (transposed, sigmoid-folded), f32
    whh1_ref: (4H, 4H)   layer-1 recurrent weights; rows [H,2H) = w_hh1^T, bf16
    b1_ref:   (1, 4H)    layer-1 combined bias (b_ih + b_hh, sigmoid-folded), f32
    w2_ref:   (4H, 4H)   layer-2 fused weights; rows [H,2H) = w_hh2^T,
                         rows [3H,4H) = w_ih2^T, bf16
    b2_ref:   (1, 4H)    layer-2 combined bias (sigmoid-folded), f32
    wfc_ref:  (1, 4H)    FC weights; only lanes [H,2H) nonzero, f32
    bfc_ref:  (1, 1)     FC bias, f32
    out_ref:  (Bp, 1)    model output
    """
    G = 4 * H
    # Gate lane layout (PyTorch order): [ i | f | g | o ], H lanes each.
    lane = jax.lax.broadcasted_iota(jnp.int32, (Bp, G), 1)
    is_g = jnp.logical_and(lane >= 2 * H, lane < 3 * H)   # tanh-gate block
    is_h1_slot = lane >= 3 * H                            # layer-2 h1_t inject slot

    # Load the two 128x128 recurrent matrices ONCE (bf16 -> 8 vregs each).
    whh1 = whh1_ref[...]
    w2 = w2_ref[...]
    b2 = b2_ref[...]
    # TODO(synk): if a bundle dump shows a repeated per-step 128x128 RHS push,
    # switch to explicit pltpu.matmul_push_rhs / matmul_acc_lhs / matmul_pop to
    # keep the recurrent weights MXU-stationary across the unrolled loop.

    # Layer-1 input projection hoisted out of the recurrence: one matmul
    # covering all T time steps (bias already folded in / sigmoid-scaled).
    gx1 = jnp.dot(x_ref[...], wih1_ref[...],
                  preferred_element_type=jnp.float32) + b1_ref[...]

    def lstm_step(gates, c):
        # Sigmoid folded into the weights: i/f/o lanes of `gates` hold x/2, so
        # sigmoid(x) == 0.5*tanh(gates) + 0.5  ->  ONE transcendental per gate
        # vector instead of tanh + exp + reciprocal.
        th = jnp.tanh(gates)
        act = jnp.where(is_g, th, 0.5 * th + 0.5)
        # act * roll(act, 2H) puts i*g on lanes [0,H) AND [2H,3H); rolling that
        # by H (either rotation direction) lands i*g on [H,2H).
        r2 = pltpu.roll(act, shift=2 * H, axis=1)        # XLU, off the VALU slot
        ig = pltpu.roll(act * r2, shift=H, axis=1)
        c_new = act * c + ig              # f*c + i*g       (valid on [H,2H))
        h_new = r2 * jnp.tanh(c_new)      # o*tanh(c_new)   (valid on [H,2H))
        return h_new, c_new

    zeros = jnp.zeros((Bp, G), jnp.float32)
    h1, c1, h2, c2 = zeros, zeros, zeros, zeros

    # Wavefronted, fully unrolled recurrence: layer-2 step t depends only on
    # h1_t, so it interleaves with (independent) layer-1 step t+1 in the same
    # VLIW bundles.  All per-step slices are aligned (8,128) vregs.
    for t in range(T):
        # ---- layer 1, step t (gx1 already contains x@Wih1 + b1) ----
        gates1 = gx1[t * Bp:(t + 1) * Bp, :] + jnp.dot(
            h1.astype(jnp.bfloat16), whh1, preferred_element_type=jnp.float32)
        h1, c1 = lstm_step(gates1, c1)

        # ---- layer 2, step t: ONE fused matmul (input proj + recurrence) ----
        # State vector: valid h2 on lanes [H,2H), fresh h1_t injected on
        # [3H,4H); w2's zero rows make every other lane inert.
        s2 = jnp.where(is_h1_slot, pltpu.roll(h1, shift=2 * H, axis=1), h2)
        gates2 = jnp.dot(s2.astype(jnp.bfloat16), w2,
                         preferred_element_type=jnp.float32) + b2
        h2, c2 = lstm_step(gates2, c2)

    # FC head fused as a lane reduction (wfc is zero outside the h2 block).
    out = jnp.sum(h2 * wfc_ref[...], axis=-1, keepdims=True) + bfc_ref[...]
    out_ref[...] = out.astype(out_ref.dtype)


# ----------------------------------------------------------------------------
# Wrappers
# ----------------------------------------------------------------------------
def light_lstm_forward(x_btd, prep):
    """Full LightLSTM forward. x_btd: (B, T, input_dim) batch-first."""
    B, T, D = x_btd.shape
    H = prep["H"]
    Bp = ((B + 7) // 8) * 8   # pad batch to one f32 sublane tile (>= 8)
    x_pad = jnp.zeros((Bp, T, D), jnp.float32).at[:B].set(x_btd.astype(jnp.float32))
    x2d = jnp.transpose(x_pad, (1, 0, 2)).reshape(T * Bp, D)   # time-major

    kernel = functools.partial(light_lstm_kernel, T=T, Bp=Bp, H=H)
    vmem = pl.BlockSpec(memory_space=pltpu.MemorySpace.VMEM)   # whole array, VMEM
    out = pl.pallas_call(
        kernel,
        out_shape=jax.ShapeDtypeStruct((Bp, 1), jnp.float32),
        in_specs=[vmem] * 8,
        out_specs=vmem,
    )(x2d, prep["wih1"], prep["whh1"], prep["b1"],
      prep["w2"], prep["b2"], prep["wfc"], prep["bfc"])
    return out[:B]


def prepare_params(params):
    """One-time weight prep (outside the forward pass): transpose, fold biases,
    fold sigmoid(x)=0.5*tanh(x/2)+0.5 into the i/f/o gate columns (scale 0.5),
    pack layer-2's input + recurrent matrices into ONE matrix, and pad into the
    lane layout the fused kernel expects (valid h/c lane block is [H, 2H))."""
    l1, l2 = params["lstm"]
    H = l1["w_hh"].shape[1]
    G = 4 * H
    lane = jnp.arange(G)
    # 0.5 on i/f/o gate columns (sigmoid folding), 1.0 on the g (tanh) block.
    col_scale = jnp.where((lane >= 2 * H) & (lane < 3 * H), 1.0, 0.5).astype(jnp.float32)

    def scale_cols(w):
        return w * col_scale[None, :]

    wih1 = scale_cols(l1["w_ih"].T.astype(jnp.float32))                      # (D, 4H)
    b1 = (col_scale * (l1["b_ih"] + l1["b_hh"]).astype(jnp.float32))[None, :]

    whh1 = jnp.zeros((G, G), jnp.float32).at[H:2 * H, :].set(
        l1["w_hh"].T.astype(jnp.float32))
    whh1 = scale_cols(whh1)                                                  # (4H, 4H)

    # Layer 2 fused matrix: rows [H,2H) read h2 (recurrent), rows [3H,4H) read
    # h1_t (layer input); all other rows zero.
    w2 = jnp.zeros((G, G), jnp.float32)
    w2 = w2.at[H:2 * H, :].set(l2["w_hh"].T.astype(jnp.float32))
    w2 = w2.at[3 * H:, :].set(l2["w_ih"].T.astype(jnp.float32))
    w2 = scale_cols(w2)                                                      # (4H, 4H)
    b2 = (col_scale * (l2["b_ih"] + l2["b_hh"]).astype(jnp.float32))[None, :]

    wfc = jnp.zeros((1, G), jnp.float32).at[:, H:2 * H].set(
        params["fc_w"].astype(jnp.float32))                                  # (1, 4H)
    bfc = params["fc_b"].astype(jnp.float32)[None, :]                        # (1, 1)

    return {
        "H": H,
        "wih1": wih1,                        # f32 (tiny, one-off matmul)
        "whh1": whh1.astype(jnp.bfloat16),   # bf16 MXU operand
        "b1": b1,
        "w2": w2.astype(jnp.bfloat16),       # bf16 MXU operand
        "b2": b2,
        "wfc": wfc,
        "bfc": bfc,
    }


# ----------------------------------------------------------------------------
# Deterministic parameter init (PyTorch-style uniform(-1/sqrt(H), 1/sqrt(H)))
# ----------------------------------------------------------------------------
def init_params(key, input_dim, hidden_dim, num_layers):
    bound = 1.0 / jnp.sqrt(jnp.float32(hidden_dim))
    params = {"lstm": []}
    for layer in range(num_layers):
        d_in = input_dim if layer == 0 else hidden_dim
        key, k1, k2, k3, k4 = jax.random.split(key, 5)
        params["lstm"].append(
            {
                "w_ih": jax.random.uniform(k1, (4 * hidden_dim, d_in),
                                           jnp.float32, -bound, bound),
                "w_hh": jax.random.uniform(k2, (4 * hidden_dim, hidden_dim),
                                           jnp.float32, -bound, bound),
                "b_ih": jax.random.uniform(k3, (4 * hidden_dim,),
                                           jnp.float32, -bound, bound),
                "b_hh": jax.random.uniform(k4, (4 * hidden_dim,),
                                           jnp.float32, -bound, bound),
            }
        )
    key, k5, k6 = jax.random.split(key, 3)
    params["fc_w"] = jax.random.uniform(k5, (1, hidden_dim),
                                        jnp.float32, -bound, bound)
    params["fc_b"] = jax.random.uniform(k6, (1,),
                                        jnp.float32, -bound, bound)
    return params


# ----------------------------------------------------------------------------
# Pure-JAX reference (for correctness check)
# ----------------------------------------------------------------------------
def reference_forward(x_btd, params):
    B, T, _ = x_btd.shape
    h_seq = jnp.transpose(x_btd, (1, 0, 2)).astype(jnp.float32)
    for layer in params["lstm"]:
        H = layer["w_hh"].shape[1]
        h = jnp.zeros((B, H), jnp.float32)
        c = jnp.zeros((B, H), jnp.float32)
        outs = []
        for t in range(T):
            gates = (h_seq[t] @ layer["w_ih"].T + layer["b_ih"]
                     + h @ layer["w_hh"].T + layer["b_hh"])
            i_g = jax.nn.sigmoid(gates[:, 0 * H:1 * H])
            f_g = jax.nn.sigmoid(gates[:, 1 * H:2 * H])
            g_g = jnp.tanh(gates[:, 2 * H:3 * H])
            o_g = jax.nn.sigmoid(gates[:, 3 * H:4 * H])
            c = f_g * c + i_g * g_g
            h = o_g * jnp.tanh(c)
            outs.append(h)
        h_seq = jnp.stack(outs, axis=0)
    return h_seq[-1] @ params["fc_w"].T + params["fc_b"]


# ----------------------------------------------------------------------------
if __name__ == "__main__":
    B, T, INPUT_DIM, HIDDEN, LAYERS = 2, 8, 4, 32, 2

    key = jax.random.PRNGKey(0)
    key, kx, kp = jax.random.split(key, 3)
    x = jax.random.normal(kx, (B, T, INPUT_DIM), jnp.float32)
    params = init_params(kp, INPUT_DIM, HIDDEN, LAYERS)
    prep = prepare_params(params)   # one-time weight transpose / fold / pad

    out = jax.block_until_ready(light_lstm_forward(x, prep))

    ref = reference_forward(x, params)
    assert out.shape == (B, 1)
    # bf16 MXU operands in the recurrence -> slightly looser tolerance than the
    # pure-f32 path (which agrees to ~1e-5); structural bugs would be O(0.1+).
    assert jnp.max(jnp.abs(out - ref)) < 3e-2, "Pallas output mismatch vs reference"

    print("KERNEL_OK")
</pallas_src>

<mosaic_0001>
module attributes {stable_mosaic.version = 11 : i64} {
  func.func @light_lstm_kernel(%arg0: memref<64x4xf32, #tpu.memory_space<vmem>>, %arg1: memref<4x128xf32, #tpu.memory_space<vmem>>, %arg2: memref<128x128xbf16, #tpu.memory_space<vmem>>, %arg3: memref<1x128xf32, #tpu.memory_space<vmem>>, %arg4: memref<128x128xbf16, #tpu.memory_space<vmem>>, %arg5: memref<1x128xf32, #tpu.memory_space<vmem>>, %arg6: memref<1x128xf32, #tpu.memory_space<vmem>>, %arg7: memref<1x1xf32, #tpu.memory_space<vmem>>, %arg8: memref<8x1xf32, #tpu.memory_space<vmem>>) attributes {dimension_semantics = [], scalar_prefetch = 0 : i64, scratch_operands = 0 : i64, tpu.core_type = #tpu.core_type<tc>} {
    %0 = tpu.iota {dimensions = array<i32: 1>} : vector<8x128xi32>
    %c64_i32 = arith.constant 64 : i32
    %1 = vector.broadcast %c64_i32 : i32 to vector<8x128xi32>
    %2 = arith.cmpi sge, %0, %1 : vector<8x128xi32>
    %c96_i32 = arith.constant 96 : i32
    %3 = vector.broadcast %c96_i32 : i32 to vector<8x128xi32>
    %4 = arith.cmpi slt, %0, %3 : vector<8x128xi32>
    %5 = arith.andi %2, %4 : vector<8x128xi1>
    %c96_i32_0 = arith.constant 96 : i32
    %6 = vector.broadcast %c96_i32_0 : i32 to vector<8x128xi32>
    %7 = arith.cmpi sge, %0, %6 : vector<8x128xi32>
    %c0 = arith.constant 0 : index
    %c0_1 = arith.constant 0 : index
    %8 = vector.load %arg2[%c0, %c0_1] : memref<128x128xbf16, #tpu.memory_space<vmem>>, vector<128x128xbf16>
    %c0_2 = arith.constant 0 : index
    %c0_3 = arith.constant 0 : index
    %9 = vector.load %arg4[%c0_2, %c0_3] : memref<128x128xbf16, #tpu.memory_space<vmem>>, vector<128x128xbf16>
    %c0_4 = arith.constant 0 : index
    %c0_5 = arith.constant 0 : index
    %10 = vector.load %arg5[%c0_4, %c0_5] : memref<1x128xf32, #tpu.memory_space<vmem>>, vector<1x128xf32>
    %c0_6 = arith.constant 0 : index
    %c0_7 = arith.constant 0 : index
    %11 = vector.load %arg0[%c0_6, %c0_7] : memref<64x4xf32, #tpu.memory_space<vmem>>, vector<64x4xf32>
    %c0_8 = arith.constant 0 : index
    %c0_9 = arith.constant 0 : index
    %12 = vector.load %arg1[%c0_8, %c0_9] : memref<4x128xf32, #tpu.memory_space<vmem>>, vector<4x128xf32>
    %cst = arith.constant dense<0.000000e+00> : vector<64x128xf32>
    %13 = tpu.matmul %11, %12, %cst {dimension_numbers = #tpu.dot_dimension_numbers<[1], [0], [0], [1], [0, 0, 1, 1], [], []>} : vector<64x4xf32>, vector<4x128xf32>, vector<64x128xf32> -> vector<64x128xf32>
    %c0_10 = arith.constant 0 : index
    %c0_11 = arith.constant 0 : index
    %14 = vector.load %arg3[%c0_10, %c0_11] : memref<1x128xf32, #tpu.memory_space<vmem>>, vector<1x128xf32>
    %15 = vector.broadcast %14 : vector<1x128xf32> to vector<64x128xf32>
    %16 = arith.addf %13, %15 : vector<64x128xf32>
    %cst_12 = arith.constant 0.000000e+00 : f32
    %17 = vector.broadcast %cst_12 : f32 to vector<8x128xf32>
    %18 = vector.extract_strided_slice %16 {offsets = [0, 0], sizes = [8, 128], strides = [1, 1]} : vector<64x128xf32> to vector<8x128xf32>
    %19 = arith.truncf %17 : vector<8x128xf32> to vector<8x128xbf16>
    %cst_13 = arith.constant dense<0.000000e+00> : vector<8x128xf32>
    %20 = tpu.matmul %19, %8, %cst_13 {dimension_numbers = #tpu.dot_dimension_numbers<[1], [0], [0], [1], [0, 0, 1, 1], [], []>} : vector<8x128xbf16>, vector<128x128xbf16>, vector<8x128xf32> -> vector<8x128xf32>
    %21 = arith.addf %18, %20 : vector<8x128xf32>
    %22 = math.tanh %21 : vector<8x128xf32>
    %cst_14 = arith.constant 5.000000e-01 : f32
    %23 = vector.broadcast %cst_14 : f32 to vector<8x128xf32>
    %24 = arith.mulf %23, %22 : vector<8x128xf32>
    %cst_15 = arith.constant 5.000000e-01 : f32
    %25 = vector.broadcast %cst_15 : f32 to vector<8x128xf32>
    %26 = arith.addf %24, %25 : vector<8x128xf32>
    %27 = arith.select %5, %22, %26 : vector<8x128xi1>, vector<8x128xf32>
    %c64_i32_16 = arith.constant 64 : i32
    %28 = tpu.dynamic_rotate %27 by %c64_i32_16 dim 1 : vector<8x128xf32>, i32 -> vector<8x128xf32>
    %29 = arith.mulf %27, %28 : vector<8x128xf32>
    %c32_i32 = arith.constant 32 : i32
    %30 = tpu.dynamic_rotate %29 by %c32_i32 dim 1 : vector<8x128xf32>, i32 -> vector<8x128xf32>
    %31 = arith.mulf %27, %17 : vector<8x128xf32>
    %32 = arith.addf %31, %30 : vector<8x128xf32>
    %33 = math.tanh %32 : vector<8x128xf32>
    %34 = arith.mulf %28, %33 : vector<8x128xf32>
    %c64_i32_17 = arith.constant 64 : i32
    %35 = tpu.dynamic_rotate %34 by %c64_i32_17 dim 1 : vector<8x128xf32>, i32 -> vector<8x128xf32>
    %36 = arith.select %7, %35, %17 : vector<8x128xi1>, vector<8x128xf32>
    %37 = arith.truncf %36 : vector<8x128xf32> to vector<8x128xbf16>
    %cst_18 = arith.constant dense<0.000000e+00> : vector<8x128xf32>
    %38 = tpu.matmul %37, %9, %cst_18 {dimension_numbers = #tpu.dot_dimension_numbers<[1], [0], [0], [1], [0, 0, 1, 1], [], []>} : vector<8x128xbf16>, vector<128x128xbf16>, vector<8x128xf32> -> vector<8x128xf32>
    %39 = vector.broadcast %10 : vector<1x128xf32> to vector<8x128xf32>
    %40 = arith.addf %38, %39 : vector<8x128xf32>
    %41 = math.tanh %40 : vector<8x128xf32>
    %cst_19 = arith.constant 5.000000e-01 : f32
    %42 = vector.broadcast %cst_19 : f32 to vector<8x128xf32>
    %43 = arith.mulf %42, %41 : vector<8x128xf32>
    %cst_20 = arith.constant 5.000000e-01 : f32
    %44 = vector.broadcast %cst_20 : f32 to vector<8x128xf32>
    %45 = arith.addf %43, %44 : vector<8x128xf32>
    %46 = arith.select %5, %41, %45 : vector<8x128xi1>, vector<8x128xf32>
    %c64_i32_21 = arith.constant 64 : i32
    %47 = tpu.dynamic_rotate %46 by %c64_i32_21 dim 1 : vector<8x128xf32>, i32 -> vector<8x128xf32>
    %48 = arith.mulf %46, %47 : vector<8x128xf32>
    %c32_i32_22 = arith.constant 32 : i32
    %49 = tpu.dynamic_rotate %48 by %c32_i32_22 dim 1 : vector<8x128xf32>, i32 -> vector<8x128xf32>
    %50 = arith.mulf %46, %17 : vector<8x128xf32>
    %51 = arith.addf %50, %49 : vector<8x128xf32>
    %52 = math.tanh %51 : vector<8x128xf32>
    %53 = arith.mulf %47, %52 : vector<8x128xf32>
    %54 = vector.extract_strided_slice %16 {offsets = [8, 0], sizes = [8, 128], strides = [1, 1]} : vector<64x128xf32> to vector<8x128xf32>
    %55 = arith.truncf %34 : vector<8x128xf32> to vector<8x128xbf16>
    %cst_23 = arith.constant dense<0.000000e+00> : vector<8x128xf32>
    %56 = tpu.matmul %55, %8, %cst_23 {dimension_numbers = #tpu.dot_dimension_numbers<[1], [0], [0], [1], [0, 0, 1, 1], [], []>} : vector<8x128xbf16>, vector<128x128xbf16>, vector<8x128xf32> -> vector<8x128xf32>
    %57 = arith.addf %54, %56 : vector<8x128xf32>
    %58 = math.tanh %57 : vector<8x128xf32>
    %cst_24 = arith.constant 5.000000e-01 : f32
    %59 = vector.broadcast %cst_24 : f32 to vector<8x128xf32>
    %60 = arith.mulf %59, %58 : vector<8x128xf32>
    %cst_25 = arith.constant 5.000000e-01 : f32
    %61 = vector.broadcast %cst_25 : f32 to vector<8x128xf32>
    %62 = arith.addf %60, %61 : vector<8x128xf32>
    %63 = arith.select %5, %58, %62 : vector<8x128xi1>, vector<8x128xf32>
    %c64_i32_26 = arith.constant 64 : i32
    %64 = tpu.dynamic_rotate %63 by %c64_i32_26 dim 1 : vector<8x128xf32>, i32 -> vector<8x128xf32>
    %65 = arith.mulf %63, %64 : vector<8x128xf32>
    %c32_i32_27 = arith.constant 32 : i32
    %66 = tpu.dynamic_rotate %65 by %c32_i32_27 dim 1 : vector<8x128xf32>, i32 -> vector<8x128xf32>
    %67 = arith.mulf %63, %32 : vector<8x128xf32>
    %68 = arith.addf %67, %66 : vector<8x128xf32>
    %69 = math.tanh %68 : vector<8x128xf32>
    %70 = arith.mulf %64, %69 : vector<8x128xf32>
    %c64_i32_28 = arith.constant 64 : i32
    %71 = tpu.dynamic_rotate %70 by %c64_i32_28 dim 1 : vector<8x128xf32>, i32 -> vector<8x128xf32>
    %72 = arith.select %7, %71, %53 : vector<8x128xi1>, vector<8x128xf32>
    %73 = arith.truncf %72 : vector<8x128xf32> to vector<8x128xbf16>
    %cst_29 = arith.constant dense<0.000000e+00> : vector<8x128xf32>
    %74 = tpu.matmul %73, %9, %cst_29 {dimension_numbers = #tpu.dot_dimension_numbers<[1], [0], [0], [1], [0, 0, 1, 1], [], []>} : vector<8x128xbf16>, vector<128x128xbf16>, vector<8x128xf32> -> vector<8x128xf32>
    %75 = vector.broadcast %10 : vector<1x128xf32> to vector<8x128xf32>
    %76 = arith.addf %74, %75 : vector<8x128xf32>
    %77 = math.tanh %76 : vector<8x128xf32>
    %cst_30 = arith.constant 5.000000e-01 : f32
    %78 = vector.broadcast %cst_30 : f32 to vector<8x128xf32>
    %79 = arith.mulf %78, %77 : vector<8x128xf32>
    %cst_31 = arith.constant 5.000000e-01 : f32
    %80 = vector.broadcast %cst_31 : f32 to vector<8x128xf32>
    %81 = arith.addf %79, %80 : vector<8x128xf32>
    %82 = arith.select %5, %77, %81 : vector<8x128xi1>, vector<8x128xf32>
    %c64_i32_32 = arith.constant 64 : i32
    %83 = tpu.dynamic_rotate %82 by %c64_i32_32 dim 1 : vector<8x128xf32>, i32 -> vector<8x128xf32>
    %84 = arith.mulf %82, %83 : vector<8x128xf32>
    %c32_i32_33 = arith.constant 32 : i32
    %85 = tpu.dynamic_rotate %84 by %c32_i32_33 dim 1 : vector<8x128xf32>, i32 -> vector<8x128xf32>
    %86 = arith.mulf %82, %51 : vector<8x128xf32>
    %87 = arith.addf %86, %85 : vector<8x128xf32>
    %88 = math.tanh %87 : vector<8x128xf32>
    %89 = arith.mulf %83, %88 : vector<8x128xf32>
    %90 = vector.extract_strided_slice %16 {offsets = [16, 0], sizes = [8, 128], strides = [1, 1]} : vector<64x128xf32> to vector<8x128xf32>
    %91 = arith.truncf %70 : vector<8x128xf32> to vector<8x128xbf16>
    %cst_34 = arith.constant dense<0.000000e+00> : vector<8x128xf32>
    %92 = tpu.matmul %91, %8, %cst_34 {dimension_numbers = #tpu.dot_dimension_numbers<[1], [0], [0], [1], [0, 0, 1, 1], [], []>} : vector<8x128xbf16>, vector<128x128xbf16>, vector<8x128xf32> -> vector<8x128xf32>
    %93 = arith.addf %90, %92 : vector<8x128xf32>
    %94 = math.tanh %93 : vector<8x128xf32>
    %cst_35 = arith.constant 5.000000e-01 : f32
    %95 = vector.broadcast %cst_35 : f32 to vector<8x128xf32>
    %96 = arith.mulf %95, %94 : vector<8x128xf32>
    %cst_36 = arith.constant 5.000000e-01 : f32
    %97 = vector.broadcast %cst_36 : f32 to vector<8x128xf32>
    %98 = arith.addf %96, %97 : vector<8x128xf32>
    %99 = arith.select %5, %94, %98 : vector<8x128xi1>, vector<8x128xf32>
    %c64_i32_37 = arith.constant 64 : i32
    %100 = tpu.dynamic_rotate %99 by %c64_i32_37 dim 1 : vector<8x128xf32>, i32 -> vector<8x128xf32>
    %101 = arith.mulf %99, %100 : vector<8x128xf32>
    %c32_i32_38 = arith.constant 32 : i32
    %102 = tpu.dynamic_rotate %101 by %c32_i32_38 dim 1 : vector<8x128xf32>, i32 -> vector<8x128xf32>
    %103 = arith.mulf %99, %68 : vector<8x128xf32>
    %104 = arith.addf %103, %102 : vector<8x128xf32>
    %105 = math.tanh %104 : vector<8x128xf32>
    %106 = arith.mulf %100, %105 : vector<8x128xf32>
    %c64_i32_39 = arith.constant 64 : i32
    %107 = tpu.dynamic_rotate %106 by %c64_i32_39 dim 1 : vector<8x128xf32>, i32 -> vector<8x128xf32>
    %108 = arith.select %7, %107, %89 : vector<8x128xi1>, vector<8x128xf32>
    %109 = arith.truncf %108 : vector<8x128xf32> to vector<8x128xbf16>
    %cst_40 = arith.constant dense<0.000000e+00> : vector<8x128xf32>
    %110 = tpu.matmul %109, %9, %cst_40 {dimension_numbers = #tpu.dot_dimension_numbers<[1], [0], [0], [1], [0, 0, 1, 1], [], []>} : vector<8x128xbf16>, vector<128x128xbf16>, vector<8x128xf32> -> vector<8x128xf32>
    %111 = vector.broadcast %10 : vector<1x128xf32> to vector<8x128xf32>
    %112 = arith.addf %110, %111 : vector<8x128xf32>
    %113 = math.tanh %112 : vector<8x128xf32>
    %cst_41 = arith.constant 5.000000e-01 : f32
    %114 = vector.broadcast %cst_41 : f32 to vector<8x128xf32>
    %115 = arith.mulf %114, %113 : vector<8x128xf32>
    %cst_42 = arith.constant 5.000000e-01 : f32
    %116 = vector.broadcast %cst_42 : f32 to vector<8x128xf32>
    %117 = arith.addf %115, %116 : vector<8x128xf32>
    %118 = arith.select %5, %113, %117 : vector<8x128xi1>, vector<8x128xf32>
    %c64_i32_43 = arith.constant 64 : i32
    %119 = tpu.dynamic_rotate %118 by %c64_i32_43 dim 1 : vector<8x128xf32>, i32 -> vector<8x128xf32>
    %120 = arith.mulf %118, %119 : vector<8x128xf32>
    %c32_i32_44 = arith.constant 32 : i32
    %121 = tpu.dynamic_rotate %120 by %c32_i32_44 dim 1 : vector<8x128xf32>, i32 -> vector<8x128xf32>
    %122 = arith.mulf %118, %87 : vector<8x128xf32>
    %123 = arith.addf %122, %121 : vector<8x128xf32>
    %124 = math.tanh %123 : vector<8x128xf32>
    %125 = arith.mulf %119, %124 : vector<8x128xf32>
    %126 = vector.extract_strided_slice %16 {offsets = [24, 0], sizes = [8, 128], strides = [1, 1]} : vector<64x128xf32> to vector<8x128xf32>
    %127 = arith.truncf %106 : vector<8x128xf32> to vector<8x128xbf16>
    %cst_45 = arith.constant dense<0.000000e+00> : vector<8x128xf32>
    %128 = tpu.matmul %127, %8, %cst_45 {dimension_numbers = #tpu.dot_dimension_numbers<[1], [0], [0], [1], [0, 0, 1, 1], [], []>} : vector<8x128xbf16>, vector<128x128xbf16>, vector<8x128xf32> -> vector<8x128xf32>
    %129 = arith.addf %126, %128 : vector<8x128xf32>
    %130 = math.tanh %129 : vector<8x128xf32>
    %cst_46 = arith.constant 5.000000e-01 : f32
    %131 = vector.broadcast %cst_46 : f32 to vector<8x128xf32>
    %132 = arith.mulf %131, %130 : vector<8x128xf32>
    %cst_47 = arith.constant 5.000000e-01 : f32
    %133 = vector.broadcast %cst_47 : f32 to vector<8x128xf32>
    %134 = arith.addf %132, %133 : vector<8x128xf32>
    %135 = arith.select %5, %130, %134 : vector<8x128xi1>, vector<8x128xf32>
    %c64_i32_48 = arith.constant 64 : i32
    %136 = tpu.dynamic_rotate %135 by %c64_i32_48 dim 1 : vector<8x128xf32>, i32 -> vector<8x128xf32>
    %137 = arith.mulf %135, %136 : vector<8x128xf32>
    %c32_i32_49 = arith.constant 32 : i32
    %138 = tpu.dynamic_rotate %137 by %c32_i32_49 dim 1 : vector<8x128xf32>, i32 -> vector<8x128xf32>
    %139 = arith.mulf %135, %104 : vector<8x128xf32>
    %140 = arith.addf %139, %138 : vector<8x128xf32>
    %141 = math.tanh %140 : vector<8x128xf32>
    %142 = arith.mulf %136, %141 : vector<8x128xf32>
    %c64_i32_50 = arith.constant 64 : i32
    %143 = tpu.dynamic_rotate %142 by %c64_i32_50 dim 1 : vector<8x128xf32>, i32 -> vector<8x128xf32>
    %144 = arith.select %7, %143, %125 : vector<8x128xi1>, vector<8x128xf32>
    %145 = arith.truncf %144 : vector<8x128xf32> to vector<8x128xbf16>
    %cst_51 = arith.constant dense<0.000000e+00> : vector<8x128xf32>
    %146 = tpu.matmul %145, %9, %cst_51 {dimension_numbers = #tpu.dot_dimension_numbers<[1], [0], [0], [1], [0, 0, 1, 1], [], []>} : vector<8x128xbf16>, vector<128x128xbf16>, vector<8x128xf32> -> vector<8x128xf32>
    %147 = vector.broadcast %10 : vector<1x128xf32> to vector<8x128xf32>
    %148 = arith.addf %146, %147 : vector<8x128xf32>
    %149 = math.tanh %148 : vector<8x128xf32>
    %cst_52 = arith.constant 5.000000e-01 : f32
    %150 = vector.broadcast %cst_52 : f32 to vector<8x128xf32>
    %151 = arith.mulf %150, %149 : vector<8x128xf32>
    %cst_53 = arith.constant 5.000000e-01 : f32
    %152 = vector.broadcast %cst_53 : f32 to vector<8x128xf32>
    %153 = arith.addf %151, %152 : vector<8x128xf32>
    %154 = arith.select %5, %149, %153 : vector<8x128xi1>, vector<8x128xf32>
    %c64_i32_54 = arith.constant 64 : i32
    %155 = tpu.dynamic_rotate %154 by %c64_i32_54 dim 1 : vector<8x128xf32>, i32 -> vector<8x128xf32>
    %156 = arith.mulf %154, %155 : vector<8x128xf32>
    %c32_i32_55 = arith.constant 32 : i32
    %157 = tpu.dynamic_rotate %156 by %c32_i32_55 dim 1 : vector<8x128xf32>, i32 -> vector<8x128xf32>
    %158 = arith.mulf %154, %123 : vector<8x128xf32>
    %159 = arith.addf %158, %157 : vector<8x128xf32>
    %160 = math.tanh %159 : vector<8x128xf32>
    %161 = arith.mulf %155, %160 : vector<8x128xf32>
    %162 = vector.extract_strided_slice %16 {offsets = [32, 0], sizes = [8, 128], strides = [1, 1]} : vector<64x128xf32> to vector<8x128xf32>
    %163 = arith.truncf %142 : vector<8x128xf32> to vector<8x128xbf16>
    %cst_56 = arith.constant dense<0.000000e+00> : vector<8x128xf32>
    %164 = tpu.matmul %163, %8, %cst_56 {dimension_numbers = #tpu.dot_dimension_numbers<[1], [0], [0], [1], [0, 0, 1, 1], [], []>} : vector<8x128xbf16>, vector<128x128xbf16>, vector<8x128xf32> -> vector<8x128xf32>
    %165 = arith.addf %162, %164 : vector<8x128xf32>
    %166 = math.tanh %165 : vector<8x128xf32>
    %cst_57 = arith.constant 5.000000e-01 : f32
    %167 = vector.broadcast %cst_57 : f32 to vector<8x128xf32>
    %168 = arith.mulf %167, %166 : vector<8x128xf32>
    %cst_58 = arith.constant 5.000000e-01 : f32
    %169 = vector.broadcast %cst_58 : f32 to vector<8x128xf32>
    %170 = arith.addf %168, %169 : vector<8x128xf32>
    %171 = arith.select %5, %166, %170 : vector<8x128xi1>, vector<8x128xf32>
    %c64_i32_59 = arith.constant 64 : i32
    %172 = tpu.dynamic_rotate %171 by %c64_i32_59 dim 1 : vector<8x128xf32>, i32 -> vector<8x128xf32>
    %173 = arith.mulf %171, %172 : vector<8x128xf32>
    %c32_i32_60 = arith.constant 32 : i32
    %174 = tpu.dynamic_rotate %173 by %c32_i32_60 dim 1 : vector<8x128xf32>, i32 -> vector<8x128xf32>
    %175 = arith.mulf %171, %140 : vector<8x128xf32>
    %176 = arith.addf %175, %174 : vector<8x128xf32>
    %177 = math.tanh %176 : vector<8x128xf32>
    %178 = arith.mulf %172, %177 : vector<8x128xf32>
    %c64_i32_61 = arith.constant 64 : i32
    %179 = tpu.dynamic_rotate %178 by %c64_i32_61 dim 1 : vector<8x128xf32>, i32 -> vector<8x128xf32>
    %180 = arith.select %7, %179, %161 : vector<8x128xi1>, vector<8x128xf32>
    %181 = arith.truncf %180 : vector<8x128xf32> to vector<8x128xbf16>
    %cst_62 = arith.constant dense<0.000000e+00> : vector<8x128xf32>
    %182 = tpu.matmul %181, %9, %cst_62 {dimension_numbers = #tpu.dot_dimension_numbers<[1], [0], [0], [1], [0, 0, 1, 1], [], []>} : vector<8x128xbf16>, vector<128x128xbf16>, vector<8x128xf32> -> vector<8x128xf32>
    %183 = vector.broadcast %10 : vector<1x128xf32> to vector<8x128xf32>
    %184 = arith.addf %182, %183 : vector<8x128xf32>
    %185 = math.tanh %184 : vector<8x128xf32>
    %cst_63 = arith.constant 5.000000e-01 : f32
    %186 = vector.broadcast %cst_63 : f32 to vector<8x128xf32>
    %187 = arith.mulf %186, %185 : vector<8x128xf32>
    %cst_64 = arith.constant 5.000000e-01 : f32
    %188 = vector.broadcast %cst_64 : f32 to vector<8x128xf32>
    %189 = arith.addf %187, %188 : vector<8x128xf32>
    %190 = arith.select %5, %185, %189 : vector<8x128xi1>, vector<8x128xf32>
    %c64_i32_65 = arith.constant 64 : i32
    %191 = tpu.dynamic_rotate %190 by %c64_i32_65 dim 1 : vector<8x128xf32>, i32 -> vector<8x128xf32>
    %192 = arith.mulf %190, %191 : vector<8x128xf32>
    %c32_i32_66 = arith.constant 32 : i32
    %193 = tpu.dynamic_rotate %192 by %c32_i32_66 dim 1 : vector<8x128xf32>, i32 -> vector<8x128xf32>
    %194 = arith.mulf %190, %159 : vector<8x128xf32>
    %195 = arith.addf %194, %193 : vector<8x128xf32>
    %196 = math.tanh %195 : vector<8x128xf32>
    %197 = arith.mulf %191, %196 : vector<8x128xf32>
    %198 = vector.extract_strided_slice %16 {offsets = [40, 0], sizes = [8, 128], strides = [1, 1]} : vector<64x128xf32> to vector<8x128xf32>
    %199 = arith.truncf %178 : vector<8x128xf32> to vector<8x128xbf16>
    %cst_67 = arith.constant dense<0.000000e+00> : vector<8x128xf32>
    %200 = tpu.matmul %199, %8, %cst_67 {dimension_numbers = #tpu.dot_dimension_numbers<[1], [0], [0], [1], [0, 0, 1, 1], [], []>} : vector<8x128xbf16>, vector<128x128xbf16>, vector<8x128xf32> -> vector<8x128xf32>
    %201 = arith.addf %198, %200 : vector<8x128xf32>
    %202 = math.tanh %201 : vector<8x128xf32>
    %cst_68 = arith.constant 5.000000e-01 : f32
    %203 = vector.broadcast %cst_68 : f32 to vector<8x128xf32>
    %204 = arith.mulf %203, %202 : vector<8x128xf32>
    %cst_69 = arith.constant 5.000000e-01 : f32
    %205 = vector.broadcast %cst_69 : f32 to vector<8x128xf32>
    %206 = arith.addf %204, %205 : vector<8x128xf32>
    %207 = arith.select %5, %202, %206 : vector<8x128xi1>, vector<8x128xf32>
    %c64_i32_70 = arith.constant 64 : i32
    %208 = tpu.dynamic_rotate %207 by %c64_i32_70 dim 1 : vector<8x128xf32>, i32 -> vector<8x128xf32>
    %209 = arith.mulf %207, %208 : vector<8x128xf32>
    %c32_i32_71 = arith.constant 32 : i32
    %210 = tpu.dynamic_rotate %209 by %c32_i32_71 dim 1 : vector<8x128xf32>, i32 -> vector<8x128xf32>
    %211 = arith.mulf %207, %176 : vector<8x128xf32>
    %212 = arith.addf %211, %210 : vector<8x128xf32>
    %213 = math.tanh %212 : vector<8x128xf32>
    %214 = arith.mulf %208, %213 : vector<8x128xf32>
    %c64_i32_72 = arith.constant 64 : i32
    %215 = tpu.dynamic_rotate %214 by %c64_i32_72 dim 1 : vector<8x128xf32>, i32 -> vector<8x128xf32>
    %216 = arith.select %7, %215, %197 : vector<8x128xi1>, vector<8x128xf32>
    %217 = arith.truncf %216 : vector<8x128xf32> to vector<8x128xbf16>
    %cst_73 = arith.constant dense<0.000000e+00> : vector<8x128xf32>
    %218 = tpu.matmul %217, %9, %cst_73 {dimension_numbers = #tpu.dot_dimension_numbers<[1], [0], [0], [1], [0, 0, 1, 1], [], []>} : vector<8x128xbf16>, vector<128x128xbf16>, vector<8x128xf32> -> vector<8x128xf32>
    %219 = vector.broadcast %10 : vector<1x128xf32> to vector<8x128xf32>
    %220 = arith.addf %218, %219 : vector<8x128xf32>
    %221 = math.tanh %220 : vector<8x128xf32>
    %cst_74 = arith.constant 5.000000e-01 : f32
    %222 = vector.broadcast %cst_74 : f32 to vector<8x128xf32>
    %223 = arith.mulf %222, %221 : vector<8x128xf32>
    %cst_75 = arith.constant 5.000000e-01 : f32
    %224 = vector.broadcast %cst_75 : f32 to vector<8x128xf32>
    %225 = arith.addf %223, %224 : vector<8x128xf32>
    %226 = arith.select %5, %221, %225 : vector<8x128xi1>, vector<8x128xf32>
    %c64_i32_76 = arith.constant 64 : i32
    %227 = tpu.dynamic_rotate %226 by %c64_i32_76 dim 1 : vector<8x128xf32>, i32 -> vector<8x128xf32>
    %228 = arith.mulf %226, %227 : vector<8x128xf32>
    %c32_i32_77 = arith.constant 32 : i32
    %229 = tpu.dynamic_rotate %228 by %c32_i32_77 dim 1 : vector<8x128xf32>, i32 -> vector<8x128xf32>
    %230 = arith.mulf %226, %195 : vector<8x128xf32>
    %231 = arith.addf %230, %229 : vector<8x128xf32>
    %232 = math.tanh %231 : vector<8x128xf32>
    %233 = arith.mulf %227, %232 : vector<8x128xf32>
    %234 = vector.extract_strided_slice %16 {offsets = [48, 0], sizes = [8, 128], strides = [1, 1]} : vector<64x128xf32> to vector<8x128xf32>
    %235 = arith.truncf %214 : vector<8x128xf32> to vector<8x128xbf16>
    %cst_78 = arith.constant dense<0.000000e+00> : vector<8x128xf32>
    %236 = tpu.matmul %235, %8, %cst_78 {dimension_numbers = #tpu.dot_dimension_numbers<[1], [0], [0], [1], [0, 0, 1, 1], [], []>} : vector<8x128xbf16>, vector<128x128xbf16>, vector<8x128xf32> -> vector<8x128xf32>
    %237 = arith.addf %234, %236 : vector<8x128xf32>
    %238 = math.tanh %237 : vector<8x128xf32>
    %cst_79 = arith.constant 5.000000e-01 : f32
    %239 = vector.broadcast %cst_79 : f32 to vector<8x128xf32>
    %240 = arith.mulf %239, %238 : vector<8x128xf32>
    %cst_80 = arith.constant 5.000000e-01 : f32
    %241 = vector.broadcast %cst_80 : f32 to vector<8x128xf32>
    %242 = arith.addf %240, %241 : vector<8x128xf32>
    %243 = arith.select %5, %238, %242 : vector<8x128xi1>, vector<8x128xf32>
    %c64_i32_81 = arith.constant 64 : i32
    %244 = tpu.dynamic_rotate %243 by %c64_i32_81 dim 1 : vector<8x128xf32>, i32 -> vector<8x128xf32>
    %245 = arith.mulf %243, %244 : vector<8x128xf32>
    %c32_i32_82 = arith.constant 32 : i32
    %246 = tpu.dynamic_rotate %245 by %c32_i32_82 dim 1 : vector<8x128xf32>, i32 -> vector<8x128xf32>
    %247 = arith.mulf %243, %212 : vector<8x128xf32>
    %248 = arith.addf %247, %246 : vector<8x128xf32>
    %249 = math.tanh %248 : vector<8x128xf32>
    %250 = arith.mulf %244, %249 : vector<8x128xf32>
    %c64_i32_83 = arith.constant 64 : i32
    %251 = tpu.dynamic_rotate %250 by %c64_i32_83 dim 1 : vector<8x128xf32>, i32 -> vector<8x128xf32>
    %252 = arith.select %7, %251, %233 : vector<8x128xi1>, vector<8x128xf32>
    %253 = arith.truncf %252 : vector<8x128xf32> to vector<8x128xbf16>
    %cst_84 = arith.constant dense<0.000000e+00> : vector<8x128xf32>
    %254 = tpu.matmul %253, %9, %cst_84 {dimension_numbers = #tpu.dot_dimension_numbers<[1], [0], [0], [1], [0, 0, 1, 1], [], []>} : vector<8x128xbf16>, vector<128x128xbf16>, vector<8x128xf32> -> vector<8x128xf32>
    %255 = vector.broadcast %10 : vector<1x128xf32> to vector<8x128xf32>
    %256 = arith.addf %254, %255 : vector<8x128xf32>
    %257 = math.tanh %256 : vector<8x128xf32>
    %cst_85 = arith.constant 5.000000e-01 : f32
    %258 = vector.broadcast %cst_85 : f32 to vector<8x128xf32>
    %259 = arith.mulf %258, %257 : vector<8x128xf32>
    %cst_86 = arith.constant 5.000000e-01 : f32
    %260 = vector.broadcast %cst_86 : f32 to vector<8x128xf32>
    %261 = arith.addf %259, %260 : vector<8x128xf32>
    %262 = arith.select %5, %257, %261 : vector<8x128xi1>, vector<8x128xf32>
    %c64_i32_87 = arith.constant 64 : i32
    %263 = tpu.dynamic_rotate %262 by %c64_i32_87 dim 1 : vector<8x128xf32>, i32 -> vector<8x128xf32>
    %264 = arith.mulf %262, %263 : vector<8x128xf32>
    %c32_i32_88 = arith.constant 32 : i32
    %265 = tpu.dynamic_rotate %264 by %c32_i32_88 dim 1 : vector<8x128xf32>, i32 -> vector<8x128xf32>
    %266 = arith.mulf %262, %231 : vector<8x128xf32>
    %267 = arith.addf %266, %265 : vector<8x128xf32>
    %268 = math.tanh %267 : vector<8x128xf32>
    %269 = arith.mulf %263, %268 : vector<8x128xf32>
    %270 = vector.extract_strided_slice %16 {offsets = [56, 0], sizes = [8, 128], strides = [1, 1]} : vector<64x128xf32> to vector<8x128xf32>
    %271 = arith.truncf %250 : vector<8x128xf32> to vector<8x128xbf16>
    %cst_89 = arith.constant dense<0.000000e+00> : vector<8x128xf32>
    %272 = tpu.matmul %271, %8, %cst_89 {dimension_numbers = #tpu.dot_dimension_numbers<[1], [0], [0], [1], [0, 0, 1, 1], [], []>} : vector<8x128xbf16>, vector<128x128xbf16>, vector<8x128xf32> -> vector<8x128xf32>
    %273 = arith.addf %270, %272 : vector<8x128xf32>
    %274 = math.tanh %273 : vector<8x128xf32>
    %cst_90 = arith.constant 5.000000e-01 : f32
    %275 = vector.broadcast %cst_90 : f32 to vector<8x128xf32>
    %276 = arith.mulf %275, %274 : vector<8x128xf32>
    %cst_91 = arith.constant 5.000000e-01 : f32
    %277 = vector.broadcast %cst_91 : f32 to vector<8x128xf32>
    %278 = arith.addf %276, %277 : vector<8x128xf32>
    %279 = arith.select %5, %274, %278 : vector<8x128xi1>, vector<8x128xf32>
    %c64_i32_92 = arith.constant 64 : i32
    %280 = tpu.dynamic_rotate %279 by %c64_i32_92 dim 1 : vector<8x128xf32>, i32 -> vector<8x128xf32>
    %281 = arith.mulf %279, %280 : vector<8x128xf32>
    %c32_i32_93 = arith.constant 32 : i32
    %282 = tpu.dynamic_rotate %281 by %c32_i32_93 dim 1 : vector<8x128xf32>, i32 -> vector<8x128xf32>
    %283 = arith.mulf %279, %248 : vector<8x128xf32>
    %284 = arith.addf %283, %282 : vector<8x128xf32>
    %285 = math.tanh %284 : vector<8x128xf32>
    %286 = arith.mulf %280, %285 : vector<8x128xf32>
    %c64_i32_94 = arith.constant 64 : i32
    %287 = tpu.dynamic_rotate %286 by %c64_i32_94 dim 1 : vector<8x128xf32>, i32 -> vector<8x128xf32>
    %288 = arith.select %7, %287, %269 : vector<8x128xi1>, vector<8x128xf32>
    %289 = arith.truncf %288 : vector<8x128xf32> to vector<8x128xbf16>
    %cst_95 = arith.constant dense<0.000000e+00> : vector<8x128xf32>
    %290 = tpu.matmul %289, %9, %cst_95 {dimension_numbers = #tpu.dot_dimension_numbers<[1], [0], [0], [1], [0, 0, 1, 1], [], []>} : vector<8x128xbf16>, vector<128x128xbf16>, vector<8x128xf32> -> vector<8x128xf32>
    %291 = vector.broadcast %10 : vector<1x128xf32> to vector<8x128xf32>
    %292 = arith.addf %290, %291 : vector<8x128xf32>
    %293 = math.tanh %292 : vector<8x128xf32>
    %cst_96 = arith.constant 5.000000e-01 : f32
    %294 = vector.broadcast %cst_96 : f32 to vector<8x128xf32>
    %295 = arith.mulf %294, %293 : vector<8x128xf32>
    %cst_97 = arith.constant 5.000000e-01 : f32
    %296 = vector.broadcast %cst_97 : f32 to vector<8x128xf32>
    %297 = arith.addf %295, %296 : vector<8x128xf32>
    %298 = arith.select %5, %293, %297 : vector<8x128xi1>, vector<8x128xf32>
    %c64_i32_98 = arith.constant 64 : i32
    %299 = tpu.dynamic_rotate %298 by %c64_i32_98 dim 1 : vector<8x128xf32>, i32 -> vector<8x128xf32>
    %300 = arith.mulf %298, %299 : vector<8x128xf32>
    %c32_i32_99 = arith.constant 32 : i32
    %301 = tpu.dynamic_rotate %300 by %c32_i32_99 dim 1 : vector<8x128xf32>, i32 -> vector<8x128xf32>
    %302 = arith.mulf %298, %267 : vector<8x128xf32>
    %303 = arith.addf %302, %301 : vector<8x128xf32>
    %304 = math.tanh %303 : vector<8x128xf32>
    %305 = arith.mulf %299, %304 : vector<8x128xf32>
    %c0_100 = arith.constant 0 : index
    %c0_101 = arith.constant 0 : index
    %306 = vector.load %arg6[%c0_100, %c0_101] : memref<1x128xf32, #tpu.memory_space<vmem>>, vector<1x128xf32>
    %307 = vector.broadcast %306 : vector<1x128xf32> to vector<8x128xf32>
    %308 = arith.mulf %305, %307 : vector<8x128xf32>
    %cst_102 = arith.constant dense<0.000000e+00> : vector<8xf32>
    %309 = vector.multi_reduction <add>, %308, %cst_102 [1] : vector<8x128xf32> to vector<8xf32>
    %310 = vector.shape_cast %309 : vector<8xf32> to vector<8x1xf32>
    %c0_103 = arith.constant 0 : index
    %c0_104 = arith.constant 0 : index
    %311 = vector.load %arg7[%c0_103, %c0_104] : memref<1x1xf32, #tpu.memory_space<vmem>>, vector<1x1xf32>
    %312 = vector.broadcast %311 : vector<1x1xf32> to vector<8x1xf32>
    %313 = arith.addf %310, %312 : vector<8x1xf32>
    %c0_105 = arith.constant 0 : index
    %c0_106 = arith.constant 0 : index
    %314 = vector.load %arg8[%c0_105, %c0_106] : memref<8x1xf32, #tpu.memory_space<vmem>>, vector<8x1xf32>
    tpu.vector_store %arg8[%c0_105, %c0_106], %313 {strides = array<i32>} : memref<8x1xf32, #tpu.memory_space<vmem>>, vector<8x1xf32>,
    return
  }
}

</mosaic_0001>

<llo_original>
// kernel: tpu_custom_call.1
$region0: #{tpu_custom_call.1}
  #allocation0 [shape = 'u32[]', space=smem, size = 0x4, offset = 0x4, fixed_abs, tag = 'smem constant byte address 0x4 - core index']
  #allocation1 [shape = 'u32[144,128]{1,0:T(1,128)}', space=vmem, size = 0x12000, scoped, tag = 'internal scratch']
  #allocation2 [shape = 'f32[1,1]{1,0:T(1,128)S(1)}', space=vmem, size = 0x200, scoped, tag = 'scoped memory for tpu_custom_call.1']
  %s0 = inlined_call_operand.vmem [shape: f32[64,4], index: 0, kind: input, shape index: {}]
  %s1 = inlined_call_operand.vmem [shape: f32[4,128], index: 1, kind: input, shape index: {}]
  %s2 = inlined_call_operand.vmem [shape: bf16[128,128], index: 2, kind: input, shape index: {}]
  %s3 = inlined_call_operand.vmem [shape: f32[1,128], index: 3, kind: input, shape index: {}]
  %s4 = inlined_call_operand.hbm [shape: bf16[128,128], index: 4, kind: input, shape index: {}]
  %s5 = inlined_call_operand.vmem [shape: f32[1,128], index: 5, kind: input, shape index: {}]
  %s6 = inlined_call_operand.vmem [shape: f32[1,128], index: 6, kind: input, shape index: {}]
  %s7 = inlined_call_operand.<no memory space> [shape: f32[1,1], index: 7, kind: input, shape index: {}]
  %s8 = inlined_call_operand.vmem [shape: f32[8,1], index: 8, kind: output, shape index: {}]
  %s9 = sld [smem:[#allocation0]]
  $region46: #{tpu_custom_call.1} parent=0
    _
  %s11 = ssub.s32 1, %s9
  %s12 = scalar_select 0, %s11, %s9
  %v13 = vstv %s7
  %14 = vst [vmem:[#allocation2] sm:$0x1] %v13
  $region1: #{tpu_custom_call.1} parent=0
    #allocation3 [shape = 'u8[32768]{0}', space=vmem, size = 0x8000, scoped, tag = 'input window, operand 4, single buffered']
    #allocation4 [shape = 's32[1]{0}', space=sflag, size = 0x4, scoped, tag = 'scoped memory for tpu_custom_call.1']
    %15 = vsyncpa [#allocation4], 0
    // Predicated region
    $region2: #{tpu_custom_call.1} parent=1 // pred_check
      _
    $region3: #{tpu_custom_call.1} parent=1 // pred_check_branch
      %17 = sbr.rel (0) target = $region5
    $region4: #{tpu_custom_call.1} parent=1 // pred_region
      _
    $region5: #{tpu_custom_call.1} parent=1 // pred_fallthru
      _
    // Predicated region
    $region6: #{tpu_custom_call.1} parent=1 // pred_check
      _
    $region7: #{tpu_custom_call.1} parent=1 // pred_check_branch
      %19 = sbr.rel (0) target = $region9
    $region8: #{tpu_custom_call.1} parent=1 // pred_region
      _
    $region9: #{tpu_custom_call.1} parent=1 // pred_fallthru
      _
    // Predicated region
    $region10: #{tpu_custom_call.1} parent=1 // pred_check
      _
    $region11: #{tpu_custom_call.1} parent=1 // pred_check_branch
      %21 = sbr.rel (0) target = $region13
    $region12: #{tpu_custom_call.1} parent=1 // pred_region
      _
    $region13: #{tpu_custom_call.1} parent=1 // pred_fallthru
      _
    // Predicated region
    $region14: #{tpu_custom_call.1} parent=1 // pred_check
      _
    $region15: #{tpu_custom_call.1} parent=1 // pred_check_branch
      %23 = sbr.rel (0) target = $region17
    $region16: #{tpu_custom_call.1} parent=1 // pred_region
      _
    $region17: #{tpu_custom_call.1} parent=1 // pred_fallthru
      _
    // Predicated region
    $region18: #{tpu_custom_call.1} parent=1 // pred_check
      _
    $region19: #{tpu_custom_call.1} parent=1 // pred_check_branch
      %25 = sbr.rel (0) target = $region21
    $region20: #{tpu_custom_call.1} parent=1 // pred_region
      %s27 = ssub.s32 1024, 1024
      %28 = vsyncadd [#allocation4], %s27
      %s29 = sshll.u32 [#allocation3], 4
      %s30 = int_to_ptr.vmem [resolvable:$true] %s29
      %35 = dma.hbm_to_vmem [thread:$0]  %s4, 1024, %s30, [#allocation4], 64, 64, 4
    $region21: #{tpu_custom_call.1} parent=1 // pred_fallthru
      _
    // Predicated region
    $region22: #{tpu_custom_call.1} parent=1 // pred_check
      _
    $region23: #{tpu_custom_call.1} parent=1 // pred_check_branch
      %37 = sbr.rel (0) target = $region25
    $region24: #{tpu_custom_call.1} parent=1 // pred_region
      _
    $region25: #{tpu_custom_call.1} parent=1 // pred_fallthru
      _
    // Predicated region
    $region26: #{tpu_custom_call.1} parent=1 // pred_check
      _
    $region27: #{tpu_custom_call.1} parent=1 // pred_check_branch
      %39 = sbr.rel (0) target = $region29
    $region28: #{tpu_custom_call.1} parent=1 // pred_region
      _
    $region29: #{tpu_custom_call.1} parent=1 // pred_fallthru
      _
    // Predicated region
    $region30: #{tpu_custom_call.1} parent=1 // pred_check
      _
    $region31: #{tpu_custom_call.1} parent=1 // pred_check_branch
      %41 = sbr.rel (0) target = $region33
    $region32: #{tpu_custom_call.1} parent=1 // pred_region
      _
    $region33: #{tpu_custom_call.1} parent=1 // pred_fallthru
      _
    // Predicated region
    $region34: #{tpu_custom_call.1} parent=1 // pred_check
      _
    $region35: #{tpu_custom_call.1} parent=1 // pred_check_branch
      %43 = sbr.rel (0) target = $region37
    $region36: #{tpu_custom_call.1} parent=1 // pred_region
      %44 = dma.done [#allocation4], 1024
    $region37: #{tpu_custom_call.1} parent=1 // pred_fallthru
      _
    %v46 = vlaneseq
    %v47 = vand.u32 %v46, 127
    %vm48 = vcmp.ge.s32.totalorder %v47, 64
    %vm49 = vcmp.lt.s32.totalorder %v47, 96
    %vm50 = vmand %vm48, %vm49
    %vm51 = vcmp.ge.s32.totalorder %v47, 96
    %v52 = vld [vmem:[%s2] sm:$0xf]
    %v53 = vld [vmem:[%s2 + $0x4] sm:$0xf]
    %v54 = vld [vmem:[%s2 + $0x8] sm:$0xf]
    %v55 = vld [vmem:[%s2 + $0xc] sm:$0xf]
    %v56 = vld [vmem:[%s2 + $0x10] sm:$0xf]
    %v57 = vld [vmem:[%s2 + $0x14] sm:$0xf]
    %v58 = vld [vmem:[%s2 + $0x18] sm:$0xf]
    %v59 = vld [vmem:[%s2 + $0x1c] sm:$0xf]
    %v60 = vld [vmem:[%s2 + $0x20] sm:$0xf]
    %v61 = vld [vmem:[%s2 + $0x24] sm:$0xf]
    %v62 = vld [vmem:[%s2 + $0x28] sm:$0xf]
    %v63 = vld [vmem:[%s2 + $0x2c] sm:$0xf]
    %v64 = vld [vmem:[%s2 + $0x30] sm:$0xf]
    %v65 = vld [vmem:[%s2 + $0x34] sm:$0xf]
    %v66 = vld [vmem:[%s2 + $0x38] sm:$0xf]
    %v67 = vld [vmem:[%s2 + $0x3c] sm:$0xf]
    %v68 = vld [vmem:[#allocation3] sm:$0xf]
    %v69 = vld [vmem:[#allocation3 + $0x4] sm:$0xf]
    %v70 = vld [vmem:[#allocation3 + $0x8] sm:$0xf]
    %v71 = vld [vmem:[#allocation3 + $0xc] sm:$0xf]
    %v72 = vld [vmem:[#allocation3 + $0x10] sm:$0xf]
    %v73 = vld [vmem:[#allocation3 + $0x14] sm:$0xf]
    %v74 = vld [vmem:[#allocation3 + $0x18] sm:$0xf]
    %v75 = vld [vmem:[#allocation3 + $0x1c] sm:$0xf]
    %v76 = vld [vmem:[#allocation3 + $0x20] sm:$0xf]
    %v77 = vld [vmem:[#allocation3 + $0x24] sm:$0xf]
    %v78 = vld [vmem:[#allocation3 + $0x28] sm:$0xf]
    %v79 = vld [vmem:[#allocation3 + $0x2c] sm:$0xf]
    %v80 = vld [vmem:[#allocation3 + $0x30] sm:$0xf]
    %v81 = vld [vmem:[#allocation3 + $0x34] sm:$0xf]
    %v82 = vld [vmem:[#allocation3 + $0x38] sm:$0xf]
    %v83 = vld [vmem:[#allocation3 + $0x3c] sm:$0xf]
    %v84 = vld [vmem:[%s5] sm:$0x1]
    %v85 = vld [vmem:[%s0] sm:$0xff]
    %v86 = vld [vmem:[%s0 + $0x8] sm:$0xff]
    %v87 = vld [vmem:[%s0 + $0x10] sm:$0xff]
    %v88 = vld [vmem:[%s0 + $0x18] sm:$0xff]
    %v89 = vld [vmem:[%s0 + $0x20] sm:$0xff]
    %v90 = vld [vmem:[%s0 + $0x28] sm:$0xff]
    %v91 = vld [vmem:[%s0 + $0x30] sm:$0xff]
    %v92 = vld [vmem:[%s0 + $0x38] sm:$0xff]
    %v93 = vld [vmem:[%s1] sm:$0xf]
    %v94 = vld [vmem:[%s3] sm:$0x1]
    %v96 = vlaneseq
    %v97 = vshrl.u32 %v96, 7
    %v98 = vsub.s32 0, %v97
    %v99 = vrot.slane %v94, %v98
    %vm101 = vcmask 31744
    %v103 = vsel %vm101, %v85, 0
    %v106 = vsel %vm101, %v86, 0
    %v109 = vsel %vm101, %v87, 0
    %v112 = vsel %vm101, %v88, 0
    %v115 = vsel %vm101, %v89, 0
    %v118 = vsel %vm101, %v90, 0
    %v121 = vsel %vm101, %v91, 0
    %v124 = vsel %vm101, %v92, 0
    %vm126 = vcmask 1043456
    %v128 = vsel %vm126, %v93, 0
    %130 = vmatprep.subr.mxu0 0.0
    %131 = vmatpush1.msra.mxu0 0.0
    %132 = vmatprep.subr.mxu0 0.0
    %133 = vmatpush1.msra.mxu0 0.0
    %134 = vmatprep.subr.mxu0 0.0
    %135 = vmatpush1.msra.mxu0 0.0
    %136 = vmatprep.subr.mxu0 0.0
    %137 = vmatpush1.msra.mxu0 0.0
    %138 = vmatprep.subr.mxu0 0.0
    %139 = vmatpush1.msra.mxu0 0.0
    %140 = vmatprep.subr.mxu0 0.0
    %141 = vmatpush1.msra.mxu0 0.0
    %142 = vmatprep.subr.mxu0 0.0
    %143 = vmatpush1.msra.mxu0 0.0
    %144 = vmatprep.subr.mxu0 0.0
    %145 = vmatpush1.msra.mxu0 0.0
    %146 = vmatprep.subr.mxu0 0.0
    %147 = vmatpush1.msra.mxu0 0.0
    %148 = vmatprep.subr.mxu0 0.0
    %149 = vmatpush1.msra.mxu0 0.0
    %150 = vmatprep.subr.mxu0 0.0
    %151 = vmatpush1.msra.mxu0 0.0
    %152 = vmatprep.subr.mxu0 0.0
    %153 = vmatpush1.msra.mxu0 0.0
    %154 = vmatprep.subr.mxu0 0.0
    %155 = vmatpush1.msra.mxu0 0.0
    %156 = vmatprep.subr.mxu0 0.0
    %157 = vmatpush1.msra.mxu0 0.0
    %158 = vmatprep.subr.mxu0 0.0
    %159 = vmatpush1.msra.mxu0 0.0
    %160 = vmatprep.subr.mxu0 0.0
    %161 = vmatpush1.msra.mxu0 %v128
    %162 = vmatprep.subr.mxu0 0.0
    %163 = vmatpush2.msra.mxu0 0.0
    %164 = vmatprep.subr.mxu0 0.0
    %165 = vmatpush2.msra.mxu0 0.0
    %166 = vmatprep.subr.mxu0 0.0
    %167 = vmatpush2.msra.mxu0 0.0
    %168 = vmatprep.subr.mxu0 0.0
    %169 = vmatpush2.msra.mxu0 0.0
    %170 = vmatprep.subr.mxu0 0.0
    %171 = vmatpush2.msra.mxu0 0.0
    %172 = vmatprep.subr.mxu0 0.0
    %173 = vmatpush2.msra.mxu0 0.0
    %174 = vmatprep.subr.mxu0 0.0
    %175 = vmatpush2.msra.mxu0 0.0
    %176 = vmatprep.subr.mxu0 0.0
    %177 = vmatpush2.msra.mxu0 0.0
    %178 = vmatprep.subr.mxu0 0.0
    %179 = vmatpush2.msra.mxu0 0.0
    %180 = vmatprep.subr.mxu0 0.0
    %181 = vmatpush2.msra.mxu0 0.0
    %182 = vmatprep.subr.mxu0 0.0
    %183 = vmatpush2.msra.mxu0 0.0
    %184 = vmatprep.subr.mxu0 0.0
    %185 = vmatpush2.msra.mxu0 0.0
    %186 = vmatprep.subr.mxu0 0.0
    %187 = vmatpush2.msra.mxu0 0.0
    %188 = vmatprep.subr.mxu0 0.0
    %189 = vmatpush2.msra.mxu0 0.0
    %190 = vmatprep.subr.mxu0 0.0
    %191 = vmatpush2.msra.mxu0 0.0
    %192 = vmatprep.subr.mxu0 0.0
    %193 = vmatpush2.msra.mxu0 0.0
    %194 = vmatprep.mubr.f32.mxu0 0.0
    %195 = vmatmul.mubr.f32.gmra.mxu0 %v103
    %v196 = vpop.f32.mrf.mxu0
    %v197 = vadd.f32 %v99, %v196
    %v198 = vpop.f32.mrf.mxu0
    %199 = vmatprep.mubr.f32.mxu0 0.0
    %200 = vmatmul.mubr.f32.gmra.mxu0 %v106
    %v201 = vpop.f32.mrf.mxu0
    %v202 = vadd.f32 %v99, %v201
    %v203 = vpop.f32.mrf.mxu0
    %204 = vmatprep.mubr.f32.mxu0 0.0
    %205 = vmatmul.mubr.f32.gmra.mxu0 %v109
    %v206 = vpop.f32.mrf.mxu0
    %v207 = vadd.f32 %v99, %v206
    %v208 = vpop.f32.mrf.mxu0
    %209 = vmatprep.mubr.f32.mxu0 0.0
    %210 = vmatmul.mubr.f32.gmra.mxu0 %v112
    %v211 = vpop.f32.mrf.mxu0
    %v212 = vadd.f32 %v99, %v211
    %v213 = vpop.f32.mrf.mxu0
    %214 = vmatprep.mubr.f32.mxu0 0.0
    %215 = vmatmul.mubr.f32.gmra.mxu0 %v115
    %v216 = vpop.f32.mrf.mxu0
    %v217 = vadd.f32 %v99, %v216
    %v218 = vpop.f32.mrf.mxu0
    %219 = vmatprep.mubr.f32.mxu0 0.0
    %220 = vmatmul.mubr.f32.gmra.mxu0 %v118
    %v221 = vpop.f32.mrf.mxu0
    %v222 = vadd.f32 %v99, %v221
    %v223 = vpop.f32.mrf.mxu0
    %224 = vmatprep.mubr.f32.mxu0 0.0
    %225 = vmatmul.mubr.f32.gmra.mxu0 %v121
    %v226 = vpop.f32.mrf.mxu0
    %v227 = vadd.f32 %v99, %v226
    %v228 = vpop.f32.mrf.mxu0
    %229 = vmatprep.mubr.f32.mxu0 0.0
    %230 = vmatmul.mubr.f32.gmra.mxu0 %v124
    %v231 = vpop.f32.mrf.mxu0
    %v232 = vadd.f32 %v99, %v231
    %v233 = vpop.f32.mrf.mxu0
    %234 = vdwg.mxu0
    %v251 = vunpack.c.l.b16 %v52
    %v252 = vunpack.c.l.b16 %v53
    %v253 = vunpack.c.l.b16 %v54
    %v254 = vunpack.c.l.b16 %v55
    %v255 = vunpack.c.l.b16 %v56
    %v256 = vunpack.c.l.b16 %v57
    %v257 = vunpack.c.l.b16 %v58
    %v258 = vunpack.c.l.b16 %v59
    %v259 = vunpack.c.l.b16 %v60
    %v260 = vunpack.c.l.b16 %v61
    %v261 = vunpack.c.l.b16 %v62
    %v262 = vunpack.c.l.b16 %v63
    %v263 = vunpack.c.l.b16 %v64
    %v264 = vunpack.c.l.b16 %v65
    %v265 = vunpack.c.l.b16 %v66
    %v266 = vunpack.c.l.b16 %v67
    %v267 = vpack.c.b16 %v252, %v251
    %v268 = vpack.c.b16 %v254, %v253
    %v269 = vpack.c.b16 %v256, %v255
    %v270 = vpack.c.b16 %v258, %v257
    %v271 = vpack.c.b16 %v260, %v259
    %v272 = vpack.c.b16 %v262, %v261
    %v273 = vpack.c.b16 %v264, %v263
    %v274 = vpack.c.b16 %v266, %v265
    %283 = vmatprep.subr.bf16.mxu0 0
    %284 = vmatpush1.bf16.msra.mxu0 %v274
    %285 = vmatprep.subr.bf16.mxu0 0
    %286 = vmatpush1.bf16.msra.mxu0 %v273
    %287 = vmatprep.subr.bf16.mxu0 0
    %288 = vmatpush1.bf16.msra.mxu0 %v272
    %289 = vmatprep.subr.bf16.mxu0 0
    %290 = vmatpush1.bf16.msra.mxu0 %v271
    %291 = vmatprep.subr.bf16.mxu0 0
    %292 = vmatpush1.bf16.msra.mxu0 %v270
    %293 = vmatprep.subr.bf16.mxu0 0
    %294 = vmatpush1.bf16.msra.mxu0 %v269
    %295 = vmatprep.subr.bf16.mxu0 0
    %296 = vmatpush1.bf16.msra.mxu0 %v268
    %297 = vmatprep.subr.bf16.mxu0 0
    %298 = vmatpush1.bf16.msra.mxu0 %v267
    %299 = vmatprep.subr.bf16.mxu0 0
    %300 = vmatpush2.bf16.msra.mxu0 0
    %301 = vmatprep.subr.bf16.mxu0 0
    %302 = vmatpush2.bf16.msra.mxu0 0
    %303 = vmatprep.subr.bf16.mxu0 0
    %304 = vmatpush2.bf16.msra.mxu0 0
    %305 = vmatprep.subr.bf16.mxu0 0
    %306 = vmatpush2.bf16.msra.mxu0 0
    %307 = vmatprep.subr.bf16.mxu0 0
    %308 = vmatpush2.bf16.msra.mxu0 0
    %309 = vmatprep.subr.bf16.mxu0 0
    %310 = vmatpush2.bf16.msra.mxu0 0
    %311 = vmatprep.subr.bf16.mxu0 0
    %312 = vmatpush2.bf16.msra.mxu0 0
    %313 = vmatprep.subr.bf16.mxu0 0
    %314 = vmatpush2.bf16.msra.mxu0 0
    %315 = vmatprep.mubr.bf16.mxu0 0
    %316 = vmatmul.mubr.bf16.gmra.mxu0 0
    %v317 = vpop.f32.mrf.mxu0
    %v318 = vadd.f32 0.0, %v317
    %v319 = vpop.f32.mrf.mxu0
    %v320 = vpop.f32.mrf.mxu0
    %v321 = vpop.f32.mrf.mxu0
    %322 = vdwg.mxu0
    %v323 = vadd.f32 %v197, %v318
    %v324 = vtanh.pop %v323
    %v325 = vmul.f32 %v324, 0.5
    %v326 = vadd.f32 %v325, 0.5
    %v327 = vsel %vm50, %v324, %v326
    %328 = vrot.lane.b32.xlu0 %v327, 64
    %v329 = vpop.permute.xlu0 %328
    %v330 = vmul.f32 %v327, %v329
    %331 = vrot.lane.b32.xlu0 %v330, 32
    %v332 = vpop.permute.xlu0 %331
    %v333 = vmul.f32 %v327, 0.0
    %v334 = vadd.f32 %v333, %v332
    %v335 = vtanh.pop %v334
    %v336 = vmul.f32 %v329, %v335
    %337 = vrot.lane.b32.xlu0 %v336, 64
    %v338 = vpop.permute.xlu0 %337
    %v339 = vsel %vm51, %v338, 0.0
    %v340 = vpack.c.bf16 %v339, %v339
    %v342 = vlaneseq
    %v343 = vshrl.u32 %v342, 7
    %v344 = vsub.s32 0, %v343
    %v345 = vrot.slane %v84, %v344
    %v363 = vunpack.c.l.b16 %v68
    %v364 = vunpack.c.l.b16 %v69
    %v365 = vunpack.c.l.b16 %v70
    %v366 = vunpack.c.l.b16 %v71
    %v367 = vunpack.c.l.b16 %v72
    %v368 = vunpack.c.l.b16 %v73
    %v369 = vunpack.c.l.b16 %v74
    %v370 = vunpack.c.l.b16 %v75
    %v371 = vunpack.c.l.b16 %v76
    %v372 = vunpack.c.l.b16 %v77
    %v373 = vunpack.c.l.b16 %v78
    %v374 = vunpack.c.l.b16 %v79
    %v375 = vunpack.c.l.b16 %v80
    %v376 = vunpack.c.l.b16 %v81
    %v377 = vunpack.c.l.b16 %v82
    %v378 = vunpack.c.l.b16 %v83
    %v379 = vpack.c.b16 %v364, %v363
    %v380 = vpack.c.b16 %v366, %v365
    %v381 = vpack.c.b16 %v368, %v367
    %v382 = vpack.c.b16 %v370, %v369
    %v383 = vpack.c.b16 %v372, %v371
    %v384 = vpack.c.b16 %v374, %v373
    %v385 = vpack.c.b16 %v376, %v375
    %v386 = vpack.c.b16 %v378, %v377
    %395 = vmatprep.subr.bf16.mxu0 0
    %396 = vmatpush1.bf16.msra.mxu0 %v386
    %397 = vmatprep.subr.bf16.mxu0 0
    %398 = vmatpush1.bf16.msra.mxu0 %v385
    %399 = vmatprep.subr.bf16.mxu0 0
    %400 = vmatpush1.bf16.msra.mxu0 %v384
    %401 = vmatprep.subr.bf16.mxu0 0
    %402 = vmatpush1.bf16.msra.mxu0 %v383
    %403 = vmatprep.subr.bf16.mxu0 0
    %404 = vmatpush1.bf16.msra.mxu0 %v382
    %405 = vmatprep.subr.bf16.mxu0 0
    %406 = vmatpush1.bf16.msra.mxu0 %v381
    %407 = vmatprep.subr.bf16.mxu0 0
    %408 = vmatpush1.bf16.msra.mxu0 %v380
    %409 = vmatprep.subr.bf16.mxu0 0
    %410 = vmatpush1.bf16.msra.mxu0 %v379
    %411 = vmatprep.subr.bf16.mxu0 0
    %412 = vmatpush2.bf16.msra.mxu0 0
    %413 = vmatprep.subr.bf16.mxu0 0
    %414 = vmatpush2.bf16.msra.mxu0 0
    %415 = vmatprep.subr.bf16.mxu0 0
    %416 = vmatpush2.bf16.msra.mxu0 0
    %417 = vmatprep.subr.bf16.mxu0 0
    %418 = vmatpush2.bf16.msra.mxu0 0
    %419 = vmatprep.subr.bf16.mxu0 0
    %420 = vmatpush2.bf16.msra.mxu0 0
    %421 = vmatprep.subr.bf16.mxu0 0
    %422 = vmatpush2.bf16.msra.mxu0 0
    %423 = vmatprep.subr.bf16.mxu0 0
    %424 = vmatpush2.bf16.msra.mxu0 0
    %425 = vmatprep.subr.bf16.mxu0 0
    %426 = vmatpush2.bf16.msra.mxu0 0
    %427 = vmatprep.mubr.bf16.mxu0 0
    %428 = vmatmul.mubr.bf16.gmra.mxu0 %v340
    %v429 = vpop.f32.mrf.mxu0
    %v430 = vadd.f32 %v345, %v429
    %v431 = vpop.f32.mrf.mxu0
    %v432 = vpop.f32.mrf.mxu0
    %v433 = vpop.f32.mrf.mxu0
    %434 = vdwg.mxu0
    %v435 = vtanh.pop %v430
    %v436 = vmul.f32 %v435, 0.5
    %v437 = vadd.f32 %v436, 0.5
    %v438 = vsel %vm50, %v435, %v437
    %439 = vrot.lane.b32.xlu0 %v438, 64
    %v440 = vpop.permute.xlu0 %439
    %v441 = vmul.f32 %v438, %v440
    %442 = vrot.lane.b32.xlu0 %v441, 32
    %v443 = vpop.permute.xlu0 %442
    %v444 = vmul.f32 %v438, 0.0
    %v445 = vadd.f32 %v444, %v443
    %v446 = vtanh.pop %v445
    %v447 = vmul.f32 %v440, %v446
    %v448 = vpack.c.bf16 %v336, %v336
    %449 = vmatprep.subr.bf16.mxu0 0
    %450 = vmatpush1.bf16.msra.mxu0 %v274
    %451 = vmatprep.subr.bf16.mxu0 0
    %452 = vmatpush1.bf16.msra.mxu0 %v273
    %453 = vmatprep.subr.bf16.mxu0 0
    %454 = vmatpush1.bf16.msra.mxu0 %v272
    %455 = vmatprep.subr.bf16.mxu0 0
    %456 = vmatpush1.bf16.msra.mxu0 %v271
    %457 = vmatprep.subr.bf16.mxu0 0
    %458 = vmatpush1.bf16.msra.mxu0 %v270
    %459 = vmatprep.subr.bf16.mxu0 0
    %460 = vmatpush1.bf16.msra.mxu0 %v269
    %461 = vmatprep.subr.bf16.mxu0 0
    %462 = vmatpush1.bf16.msra.mxu0 %v268
    %463 = vmatprep.subr.bf16.mxu0 0
    %464 = vmatpush1.bf16.msra.mxu0 %v267
    %465 = vmatprep.subr.bf16.mxu0 0
    %466 = vmatpush2.bf16.msra.mxu0 0
    %467 = vmatprep.subr.bf16.mxu0 0
    %468 = vmatpush2.bf16.msra.mxu0 0
    %469 = vmatprep.subr.bf16.mxu0 0
    %470 = vmatpush2.bf16.msra.mxu0 0
    %471 = vmatprep.subr.bf16.mxu0 0
    %472 = vmatpush2.bf16.msra.mxu0 0
    %473 = vmatprep.subr.bf16.mxu0 0
    %474 = vmatpush2.bf16.msra.mxu0 0
    %475 = vmatprep.subr.bf16.mxu0 0
    %476 = vmatpush2.bf16.msra.mxu0 0
    %477 = vmatprep.subr.bf16.mxu0 0
    %478 = vmatpush2.bf16.msra.mxu0 0
    %479 = vmatprep.subr.bf16.mxu0 0
    %480 = vmatpush2.bf16.msra.mxu0 0
    %481 = vmatprep.mubr.bf16.mxu0 0
    %482 = vmatmul.mubr.bf16.gmra.mxu0 %v448
    %v483 = vpop.f32.mrf.mxu0
    %v484 = vadd.f32 0.0, %v483
    %v485 = vpop.f32.mrf.mxu0
    %v486 = vpop.f32.mrf.mxu0
    %v487 = vpop.f32.mrf.mxu0
    %488 = vdwg.mxu0
    %v489 = vadd.f32 %v202, %v484
    %v490 = vtanh.pop %v489
    %v491 = vmul.f32 %v490, 0.5
    %v492 = vadd.f32 %v491, 0.5
    %v493 = vsel %vm50, %v490, %v492
    %494 = vrot.lane.b32.xlu0 %v493, 64
    %v495 = vpop.permute.xlu0 %494
    %v496 = vmul.f32 %v493, %v495
    %497 = vrot.lane.b32.xlu0 %v496, 32
    %v498 = vpop.permute.xlu0 %497
    %v499 = vmul.f32 %v493, %v334
    %v500 = vadd.f32 %v499, %v498
    %v501 = vtanh.pop %v500
    %v502 = vmul.f32 %v495, %v501
    %503 = vrot.lane.b32.xlu0 %v502, 64
    %v504 = vpop.permute.xlu0 %503
    %v505 = vsel %vm51, %v504, %v447
    %v506 = vpack.c.bf16 %v505, %v505
    %507 = vmatprep.subr.bf16.mxu0 0
    %508 = vmatpush1.bf16.msra.mxu0 %v386
    %509 = vmatprep.subr.bf16.mxu0 0
    %510 = vmatpush1.bf16.msra.mxu0 %v385
    %511 = vmatprep.subr.bf16.mxu0 0
    %512 = vmatpush1.bf16.msra.mxu0 %v384
    %513 = vmatprep.subr.bf16.mxu0 0
    %514 = vmatpush1.bf16.msra.mxu0 %v383
    %515 = vmatprep.subr.bf16.mxu0 0
    %516 = vmatpush1.bf16.msra.mxu0 %v382
    %517 = vmatprep.subr.bf16.mxu0 0
    %518 = vmatpush1.bf16.msra.mxu0 %v381
    %519 = vmatprep.subr.bf16.mxu0 0
    %520 = vmatpush1.bf16.msra.mxu0 %v380
    %521 = vmatprep.subr.bf16.mxu0 0
    %522 = vmatpush1.bf16.msra.mxu0 %v379
    %523 = vmatprep.subr.bf16.mxu0 0
    %524 = vmatpush2.bf16.msra.mxu0 0
    %525 = vmatprep.subr.bf16.mxu0 0
    %526 = vmatpush2.bf16.msra.mxu0 0
    %527 = vmatprep.subr.bf16.mxu0 0
    %528 = vmatpush2.bf16.msra.mxu0 0
    %529 = vmatprep.subr.bf16.mxu0 0
    %530 = vmatpush2.bf16.msra.mxu0 0
    %531 = vmatprep.subr.bf16.mxu0 0
    %532 = vmatpush2.bf16.msra.mxu0 0
    %533 = vmatprep.subr.bf16.mxu0 0
    %534 = vmatpush2.bf16.msra.mxu0 0
    %535 = vmatprep.subr.bf16.mxu0 0
    %536 = vmatpush2.bf16.msra.mxu0 0
    %537 = vmatprep.subr.bf16.mxu0 0
    %538 = vmatpush2.bf16.msra.mxu0 0
    %539 = vmatprep.mubr.bf16.mxu0 0
    %540 = vmatmul.mubr.bf16.gmra.mxu0 %v506
    %v541 = vpop.f32.mrf.mxu0
    %v542 = vadd.f32 %v345, %v541
    %v543 = vpop.f32.mrf.mxu0
    %v544 = vpop.f32.mrf.mxu0
    %v545 = vpop.f32.mrf.mxu0
    %546 = vdwg.mxu0
    %v547 = vtanh.pop %v542
    %v548 = vmul.f32 %v547, 0.5
    %v549 = vadd.f32 %v548, 0.5
    %v550 = vsel %vm50, %v547, %v549
    %551 = vrot.lane.b32.xlu0 %v550, 64
    %v552 = vpop.permute.xlu0 %551
    %v553 = vmul.f32 %v550, %v552
    %554 = vrot.lane.b32.xlu0 %v553, 32
    %v555 = vpop.permute.xlu0 %554
    %v556 = vmul.f32 %v550, %v445
    %v557 = vadd.f32 %v556, %v555
    %v558 = vtanh.pop %v557
    %v559 = vmul.f32 %v552, %v558
    %v560 = vpack.c.bf16 %v502, %v502
    %561 = vmatprep.subr.bf16.mxu0 0
    %562 = vmatpush1.bf16.msra.mxu0 %v274
    %563 = vmatprep.subr.bf16.mxu0 0
    %564 = vmatpush1.bf16.msra.mxu0 %v273
    %565 = vmatprep.subr.bf16.mxu0 0
    %566 = vmatpush1.bf16.msra.mxu0 %v272
    %567 = vmatprep.subr.bf16.mxu0 0
    %568 = vmatpush1.bf16.msra.mxu0 %v271
    %569 = vmatprep.subr.bf16.mxu0 0
    %570 = vmatpush1.bf16.msra.mxu0 %v270
    %571 = vmatprep.subr.bf16.mxu0 0
    %572 = vmatpush1.bf16.msra.mxu0 %v269
    %573 = vmatprep.subr.bf16.mxu0 0
    %574 = vmatpush1.bf16.msra.mxu0 %v268
    %575 = vmatprep.subr.bf16.mxu0 0
    %576 = vmatpush1.bf16.msra.mxu0 %v267
    %577 = vmatprep.subr.bf16.mxu0 0
    %578 = vmatpush2.bf16.msra.mxu0 0
    %579 = vmatprep.subr.bf16.mxu0 0
    %580 = vmatpush2.bf16.msra.mxu0 0
    %581 = vmatprep.subr.bf16.mxu0 0
    %582 = vmatpush2.bf16.msra.mxu0 0
    %583 = vmatprep.subr.bf16.mxu0 0
    %584 = vmatpush2.bf16.msra.mxu0 0
    %585 = vmatprep.subr.bf16.mxu0 0
    %586 = vmatpush2.bf16.msra.mxu0 0
    %587 = vmatprep.subr.bf16.mxu0 0
    %588 = vmatpush2.bf16.msra.mxu0 0
    %589 = vmatprep.subr.bf16.mxu0 0
    %590 = vmatpush2.bf16.msra.mxu0 0
    %591 = vmatprep.subr.bf16.mxu0 0
    %592 = vmatpush2.bf16.msra.mxu0 0
    %593 = vmatprep.mubr.bf16.mxu0 0
    %594 = vmatmul.mubr.bf16.gmra.mxu0 %v560
    %v595 = vpop.f32.mrf.mxu0
    %v596 = vadd.f32 0.0, %v595
    %v597 = vpop.f32.mrf.mxu0
    %v598 = vpop.f32.mrf.mxu0
    %v599 = vpop.f32.mrf.mxu0
    %600 = vdwg.mxu0
    %v601 = vadd.f32 %v207, %v596
    %v602 = vtanh.pop %v601
    %v603 = vmul.f32 %v602, 0.5
    %v604 = vadd.f32 %v603, 0.5
    %v605 = vsel %vm50, %v602, %v604
    %606 = vrot.lane.b32.xlu0 %v605, 64
    %v607 = vpop.permute.xlu0 %606
    %v608 = vmul.f32 %v605, %v607
    %609 = vrot.lane.b32.xlu0 %v608, 32
    %v610 = vpop.permute.xlu0 %609
    %v611 = vmul.f32 %v605, %v500
    %v612 = vadd.f32 %v611, %v610
    %v613 = vtanh.pop %v612
    %v614 = vmul.f32 %v607, %v613
    %615 = vrot.lane.b32.xlu0 %v614, 64
    %v616 = vpop.permute.xlu0 %615
    %v617 = vsel %vm51, %v616, %v559
    %v618 = vpack.c.bf16 %v617, %v617
    %619 = vmatprep.subr.bf16.mxu0 0
    %620 = vmatpush1.bf16.msra.mxu0 %v386
    %621 = vmatprep.subr.bf16.mxu0 0
    %622 = vmatpush1.bf16.msra.mxu0 %v385
    %623 = vmatprep.subr.bf16.mxu0 0
    %624 = vmatpush1.bf16.msra.mxu0 %v384
    %625 = vmatprep.subr.bf16.mxu0 0
    %626 = vmatpush1.bf16.msra.mxu0 %v383
    %627 = vmatprep.subr.bf16.mxu0 0
    %628 = vmatpush1.bf16.msra.mxu0 %v382
    %629 = vmatprep.subr.bf16.mxu0 0
    %630 = vmatpush1.bf16.msra.mxu0 %v381
    %631 = vmatprep.subr.bf16.mxu0 0
    %632 = vmatpush1.bf16.msra.mxu0 %v380
    %633 = vmatprep.subr.bf16.mxu0 0
    %634 = vmatpush1.bf16.msra.mxu0 %v379
    %635 = vmatprep.subr.bf16.mxu0 0
    %636 = vmatpush2.bf16.msra.mxu0 0
    %637 = vmatprep.subr.bf16.mxu0 0
    %638 = vmatpush2.bf16.msra.mxu0 0
    %639 = vmatprep.subr.bf16.mxu0 0
    %640 = vmatpush2.bf16.msra.mxu0 0
    %641 = vmatprep.subr.bf16.mxu0 0
    %642 = vmatpush2.bf16.msra.mxu0 0
    %643 = vmatprep.subr.bf16.mxu0 0
    %644 = vmatpush2.bf16.msra.mxu0 0
    %645 = vmatprep.subr.bf16.mxu0 0
    %646 = vmatpush2.bf16.msra.mxu0 0
    %647 = vmatprep.subr.bf16.mxu0 0
    %648 = vmatpush2.bf16.msra.mxu0 0
    %649 = vmatprep.subr.bf16.mxu0 0
    %650 = vmatpush2.bf16.msra.mxu0 0
    %651 = vmatprep.mubr.bf16.mxu0 0
    %652 = vmatmul.mubr.bf16.gmra.mxu0 %v618
    %v653 = vpop.f32.mrf.mxu0
    %v654 = vadd.f32 %v345, %v653
    %v655 = vpop.f32.mrf.mxu0
    %v656 = vpop.f32.mrf.mxu0
    %v657 = vpop.f32.mrf.mxu0
    %658 = vdwg.mxu0
    %v659 = vtanh.pop %v654
    %v660 = vmul.f32 %v659, 0.5
    %v661 = vadd.f32 %v660, 0.5
    %v662 = vsel %vm50, %v659, %v661
    %663 = vrot.lane.b32.xlu0 %v662, 64
    %v664 = vpop.permute.xlu0 %663
    %v665 = vmul.f32 %v662, %v664
    %666 = vrot.lane.b32.xlu0 %v665, 32
    %v667 = vpop.permute.xlu0 %666
    %v668 = vmul.f32 %v662, %v557
    %v669 = vadd.f32 %v668, %v667
    %v670 = vtanh.pop %v669
    %v671 = vmul.f32 %v664, %v670
    %v672 = vpack.c.bf16 %v614, %v614
    %673 = vmatprep.subr.bf16.mxu0 0
    %674 = vmatpush1.bf16.msra.mxu0 %v274
    %675 = vmatprep.subr.bf16.mxu0 0
    %676 = vmatpush1.bf16.msra.mxu0 %v273
    %677 = vmatprep.subr.bf16.mxu0 0
    %678 = vmatpush1.bf16.msra.mxu0 %v272
    %679 = vmatprep.subr.bf16.mxu0 0
    %680 = vmatpush1.bf16.msra.mxu0 %v271
    %681 = vmatprep.subr.bf16.mxu0 0
    %682 = vmatpush1.bf16.msra.mxu0 %v270
    %683 = vmatprep.subr.bf16.mxu0 0
    %684 = vmatpush1.bf16.msra.mxu0 %v269
    %685 = vmatprep.subr.bf16.mxu0 0
    %686 = vmatpush1.bf16.msra.mxu0 %v268
    %687 = vmatprep.subr.bf16.mxu0 0
    %688 = vmatpush1.bf16.msra.mxu0 %v267
    %689 = vmatprep.subr.bf16.mxu0 0
    %690 = vmatpush2.bf16.msra.mxu0 0
    %691 = vmatprep.subr.bf16.mxu0 0
    %692 = vmatpush2.bf16.msra.mxu0 0
    %693 = vmatprep.subr.bf16.mxu0 0
    %694 = vmatpush2.bf16.msra.mxu0 0
    %695 = vmatprep.subr.bf16.mxu0 0
    %696 = vmatpush2.bf16.msra.mxu0 0
    %697 = vmatprep.subr.bf16.mxu0 0
    %698 = vmatpush2.bf16.msra.mxu0 0
    %699 = vmatprep.subr.bf16.mxu0 0
    %700 = vmatpush2.bf16.msra.mxu0 0
    %701 = vmatprep.subr.bf16.mxu0 0
    %702 = vmatpush2.bf16.msra.mxu0 0
    %703 = vmatprep.subr.bf16.mxu0 0
    %704 = vmatpush2.bf16.msra.mxu0 0
    %705 = vmatprep.mubr.bf16.mxu0 0
    %706 = vmatmul.mubr.bf16.gmra.mxu0 %v672
    %v707 = vpop.f32.mrf.mxu0
    %v708 = vadd.f32 0.0, %v707
    %v709 = vpop.f32.mrf.mxu0
    %v710 = vpop.f32.mrf.mxu0
    %v711 = vpop.f32.mrf.mxu0
    %712 = vdwg.mxu0
    %v713 = vadd.f32 %v212, %v708
    %v714 = vtanh.pop %v713
    %v715 = vmul.f32 %v714, 0.5
    %v716 = vadd.f32 %v715, 0.5
    %v717 = vsel %vm50, %v714, %v716
    %718 = vrot.lane.b32.xlu0 %v717, 64
    %v719 = vpop.permute.xlu0 %718
    %v720 = vmul.f32 %v717, %v719
    %721 = vrot.lane.b32.xlu0 %v720, 32
    %v722 = vpop.permute.xlu0 %721
    %v723 = vmul.f32 %v717, %v612
    %v724 = vadd.f32 %v723, %v722
    %v725 = vtanh.pop %v724
    %v726 = vmul.f32 %v719, %v725
    %727 = vrot.lane.b32.xlu0 %v726, 64
    %v728 = vpop.permute.xlu0 %727
    %v729 = vsel %vm51, %v728, %v671
    %v730 = vpack.c.bf16 %v729, %v729
    %731 = vmatprep.subr.bf16.mxu0 0
    %732 = vmatpush1.bf16.msra.mxu0 %v386
    %733 = vmatprep.subr.bf16.mxu0 0
    %734 = vmatpush1.bf16.msra.mxu0 %v385
    %735 = vmatprep.subr.bf16.mxu0 0
    %736 = vmatpush1.bf16.msra.mxu0 %v384
    %737 = vmatprep.subr.bf16.mxu0 0
    %738 = vmatpush1.bf16.msra.mxu0 %v383
    %739 = vmatprep.subr.bf16.mxu0 0
    %740 = vmatpush1.bf16.msra.mxu0 %v382
    %741 = vmatprep.subr.bf16.mxu0 0
    %742 = vmatpush1.bf16.msra.mxu0 %v381
    %743 = vmatprep.subr.bf16.mxu0 0
    %744 = vmatpush1.bf16.msra.mxu0 %v380
    %745 = vmatprep.subr.bf16.mxu0 0
    %746 = vmatpush1.bf16.msra.mxu0 %v379
    %747 = vmatprep.subr.bf16.mxu0 0
    %748 = vmatpush2.bf16.msra.mxu0 0
    %749 = vmatprep.subr.bf16.mxu0 0
    %750 = vmatpush2.bf16.msra.mxu0 0
    %751 = vmatprep.subr.bf16.mxu0 0
    %752 = vmatpush2.bf16.msra.mxu0 0
    %753 = vmatprep.subr.bf16.mxu0 0
    %754 = vmatpush2.bf16.msra.mxu0 0
    %755 = vmatprep.subr.bf16.mxu0 0
    %756 = vmatpush2.bf16.msra.mxu0 0
    %757 = vmatprep.subr.bf16.mxu0 0
    %758 = vmatpush2.bf16.msra.mxu0 0
    %759 = vmatprep.subr.bf16.mxu0 0
    %760 = vmatpush2.bf16.msra.mxu0 0
    %761 = vmatprep.subr.bf16.mxu0 0
    %762 = vmatpush2.bf16.msra.mxu0 0
    %763 = vmatprep.mubr.bf16.mxu0 0
    %764 = vmatmul.mubr.bf16.gmra.mxu0 %v730
    %v765 = vpop.f32.mrf.mxu0
    %v766 = vadd.f32 %v345, %v765
    %v767 = vpop.f32.mrf.mxu0
    %v768 = vpop.f32.mrf.mxu0
    %v769 = vpop.f32.mrf.mxu0
    %770 = vdwg.mxu0
    %v771 = vtanh.pop %v766
    %v772 = vmul.f32 %v771, 0.5
    %v773 = vadd.f32 %v772, 0.5
    %v774 = vsel %vm50, %v771, %v773
    %775 = vrot.lane.b32.xlu0 %v774, 64
    %v776 = vpop.permute.xlu0 %775
    %v777 = vmul.f32 %v774, %v776
    %778 = vrot.lane.b32.xlu0 %v777, 32
    %v779 = vpop.permute.xlu0 %778
    %v780 = vmul.f32 %v774, %v669
    %v781 = vadd.f32 %v780, %v779
    %v782 = vtanh.pop %v781
    %v783 = vmul.f32 %v776, %v782
    %v784 = vpack.c.bf16 %v726, %v726
    %785 = vmatprep.subr.bf16.mxu0 0
    %786 = vmatpush1.bf16.msra.mxu0 %v274
    %787 = vmatprep.subr.bf16.mxu0 0
    %788 = vmatpush1.bf16.msra.mxu0 %v273
    %789 = vmatprep.subr.bf16.mxu0 0
    %790 = vmatpush1.bf16.msra.mxu0 %v272
    %791 = vmatprep.subr.bf16.mxu0 0
    %792 = vmatpush1.bf16.msra.mxu0 %v271
    %793 = vmatprep.subr.bf16.mxu0 0
    %794 = vmatpush1.bf16.msra.mxu0 %v270
    %795 = vmatprep.subr.bf16.mxu0 0
    %796 = vmatpush1.bf16.msra.mxu0 %v269
    %797 = vmatprep.subr.bf16.mxu0 0
    %798 = vmatpush1.bf16.msra.mxu0 %v268
    %799 = vmatprep.subr.bf16.mxu0 0
    %800 = vmatpush1.bf16.msra.mxu0 %v267
    %801 = vmatprep.subr.bf16.mxu0 0
    %802 = vmatpush2.bf16.msra.mxu0 0
    %803 = vmatprep.subr.bf16.mxu0 0
    %804 = vmatpush2.bf16.msra.mxu0 0
    %805 = vmatprep.subr.bf16.mxu0 0
    %806 = vmatpush2.bf16.msra.mxu0 0
    %807 = vmatprep.subr.bf16.mxu0 0
    %808 = vmatpush2.bf16.msra.mxu0 0
    %809 = vmatprep.subr.bf16.mxu0 0
    %810 = vmatpush2.bf16.msra.mxu0 0
    %811 = vmatprep.subr.bf16.mxu0 0
    %812 = vmatpush2.bf16.msra.mxu0 0
    %813 = vmatprep.subr.bf16.mxu0 0
    %814 = vmatpush2.bf16.msra.mxu0 0
    %815 = vmatprep.subr.bf16.mxu0 0
    %816 = vmatpush2.bf16.msra.mxu0 0
    %817 = vmatprep.mubr.bf16.mxu0 0
    %818 = vmatmul.mubr.bf16.gmra.mxu0 %v784
    %v819 = vpop.f32.mrf.mxu0
    %v820 = vadd.f32 0.0, %v819
    %v821 = vpop.f32.mrf.mxu0
    %v822 = vpop.f32.mrf.mxu0
    %v823 = vpop.f32.mrf.mxu0
    %824 = vdwg.mxu0
    %v825 = vadd.f32 %v217, %v820
    %v826 = vtanh.pop %v825
    %v827 = vmul.f32 %v826, 0.5
    %v828 = vadd.f32 %v827, 0.5
    %v829 = vsel %vm50, %v826, %v828
    %830 = vrot.lane.b32.xlu0 %v829, 64
    %v831 = vpop.permute.xlu0 %830
    %v832 = vmul.f32 %v829, %v831
    %833 = vrot.lane.b32.xlu0 %v832, 32
    %v834 = vpop.permute.xlu0 %833
    %v835 = vmul.f32 %v829, %v724
    %v836 = vadd.f32 %v835, %v834
    %v837 = vtanh.pop %v836
    %v838 = vmul.f32 %v831, %v837
    %839 = vrot.lane.b32.xlu0 %v838, 64
    %v840 = vpop.permute.xlu0 %839
    %v841 = vsel %vm51, %v840, %v783
    %v842 = vpack.c.bf16 %v841, %v841
    %843 = vmatprep.subr.bf16.mxu0 0
    %844 = vmatpush1.bf16.msra.mxu0 %v386
    %845 = vmatprep.subr.bf16.mxu0 0
    %846 = vmatpush1.bf16.msra.mxu0 %v385
    %847 = vmatprep.subr.bf16.mxu0 0
    %848 = vmatpush1.bf16.msra.mxu0 %v384
    %849 = vmatprep.subr.bf16.mxu0 0
    %850 = vmatpush1.bf16.msra.mxu0 %v383
    %851 = vmatprep.subr.bf16.mxu0 0
    %852 = vmatpush1.bf16.msra.mxu0 %v382
    %853 = vmatprep.subr.bf16.mxu0 0
    %854 = vmatpush1.bf16.msra.mxu0 %v381
    %855 = vmatprep.subr.bf16.mxu0 0
    %856 = vmatpush1.bf16.msra.mxu0 %v380
    %857 = vmatprep.subr.bf16.mxu0 0
    %858 = vmatpush1.bf16.msra.mxu0 %v379
    %859 = vmatprep.subr.bf16.mxu0 0
    %860 = vmatpush2.bf16.msra.mxu0 0
    %861 = vmatprep.subr.bf16.mxu0 0
    %862 = vmatpush2.bf16.msra.mxu0 0
    %863 = vmatprep.subr.bf16.mxu0 0
    %864 = vmatpush2.bf16.msra.mxu0 0
    %865 = vmatprep.subr.bf16.mxu0 0
    %866 = vmatpush2.bf16.msra.mxu0 0
    %867 = vmatprep.subr.bf16.mxu0 0
    %868 = vmatpush2.bf16.msra.mxu0 0
    %869 = vmatprep.subr.bf16.mxu0 0
    %870 = vmatpush2.bf16.msra.mxu0 0
    %871 = vmatprep.subr.bf16.mxu0 0
    %872 = vmatpush2.bf16.msra.mxu0 0
    %873 = vmatprep.subr.bf16.mxu0 0
    %874 = vmatpush2.bf16.msra.mxu0 0
    %875 = vmatprep.mubr.bf16.mxu0 0
    %876 = vmatmul.mubr.bf16.gmra.mxu0 %v842
    %v877 = vpop.f32.mrf.mxu0
    %v878 = vadd.f32 %v345, %v877
    %v879 = vpop.f32.mrf.mxu0
    %v880 = vpop.f32.mrf.mxu0
    %v881 = vpop.f32.mrf.mxu0
    %882 = vdwg.mxu0
    %v883 = vtanh.pop %v878
    %v884 = vmul.f32 %v883, 0.5
    %v885 = vadd.f32 %v884, 0.5
    %v886 = vsel %vm50, %v883, %v885
    %887 = vrot.lane.b32.xlu0 %v886, 64
    %v888 = vpop.permute.xlu0 %887
    %v889 = vmul.f32 %v886, %v888
    %890 = vrot.lane.b32.xlu0 %v889, 32
    %v891 = vpop.permute.xlu0 %890
    %v892 = vmul.f32 %v886, %v781
    %v893 = vadd.f32 %v892, %v891
    %v894 = vtanh.pop %v893
    %v895 = vmul.f32 %v888, %v894
    %v896 = vpack.c.bf16 %v838, %v838
    %897 = vmatprep.subr.bf16.mxu0 0
    %898 = vmatpush1.bf16.msra.mxu0 %v274
    %899 = vmatprep.subr.bf16.mxu0 0
    %900 = vmatpush1.bf16.msra.mxu0 %v273
    %901 = vmatprep.subr.bf16.mxu0 0
    %902 = vmatpush1.bf16.msra.mxu0 %v272
    %903 = vmatprep.subr.bf16.mxu0 0
    %904 = vmatpush1.bf16.msra.mxu0 %v271
    %905 = vmatprep.subr.bf16.mxu0 0
    %906 = vmatpush1.bf16.msra.mxu0 %v270
    %907 = vmatprep.subr.bf16.mxu0 0
    %908 = vmatpush1.bf16.msra.mxu0 %v269
    %909 = vmatprep.subr.bf16.mxu0 0
    %910 = vmatpush1.bf16.msra.mxu0 %v268
    %911 = vmatprep.subr.bf16.mxu0 0
    %912 = vmatpush1.bf16.msra.mxu0 %v267
    %913 = vmatprep.subr.bf16.mxu0 0
    %914 = vmatpush2.bf16.msra.mxu0 0
    %915 = vmatprep.subr.bf16.mxu0 0
    %916 = vmatpush2.bf16.msra.mxu0 0
    %917 = vmatprep.subr.bf16.mxu0 0
    %918 = vmatpush2.bf16.msra.mxu0 0
    %919 = vmatprep.subr.bf16.mxu0 0
    %920 = vmatpush2.bf16.msra.mxu0 0
    %921 = vmatprep.subr.bf16.mxu0 0
    %922 = vmatpush2.bf16.msra.mxu0 0
    %923 = vmatprep.subr.bf16.mxu0 0
    %924 = vmatpush2.bf16.msra.mxu0 0
    %925 = vmatprep.subr.bf16.mxu0 0
    %926 = vmatpush2.bf16.msra.mxu0 0
    %927 = vmatprep.subr.bf16.mxu0 0
    %928 = vmatpush2.bf16.msra.mxu0 0
    %929 = vmatprep.mubr.bf16.mxu0 0
    %930 = vmatmul.mubr.bf16.gmra.mxu0 %v896
    %v931 = vpop.f32.mrf.mxu0
    %v932 = vadd.f32 0.0, %v931
    %v933 = vpop.f32.mrf.mxu0
    %v934 = vpop.f32.mrf.mxu0
    %v935 = vpop.f32.mrf.mxu0
    %936 = vdwg.mxu0
    %v937 = vadd.f32 %v222, %v932
    %v938 = vtanh.pop %v937
    %v939 = vmul.f32 %v938, 0.5
    %v940 = vadd.f32 %v939, 0.5
    %v941 = vsel %vm50, %v938, %v940
    %942 = vrot.lane.b32.xlu0 %v941, 64
    %v943 = vpop.permute.xlu0 %942
    %v944 = vmul.f32 %v941, %v943
    %945 = vrot.lane.b32.xlu0 %v944, 32
    %v946 = vpop.permute.xlu0 %945
    %v947 = vmul.f32 %v941, %v836
    %v948 = vadd.f32 %v947, %v946
    %v949 = vtanh.pop %v948
    %v950 = vmul.f32 %v943, %v949
    %951 = vrot.lane.b32.xlu0 %v950, 64
    %v952 = vpop.permute.xlu0 %951
    %v953 = vsel %vm51, %v952, %v895
    %v954 = vpack.c.bf16 %v953, %v953
    %955 = vmatprep.subr.bf16.mxu0 0
    %956 = vmatpush1.bf16.msra.mxu0 %v386
    %957 = vmatprep.subr.bf16.mxu0 0
    %958 = vmatpush1.bf16.msra.mxu0 %v385
    %959 = vmatprep.subr.bf16.mxu0 0
    %960 = vmatpush1.bf16.msra.mxu0 %v384
    %961 = vmatprep.subr.bf16.mxu0 0
    %962 = vmatpush1.bf16.msra.mxu0 %v383
    %963 = vmatprep.subr.bf16.mxu0 0
    %964 = vmatpush1.bf16.msra.mxu0 %v382
    %965 = vmatprep.subr.bf16.mxu0 0
    %966 = vmatpush1.bf16.msra.mxu0 %v381
    %967 = vmatprep.subr.bf16.mxu0 0
    %968 = vmatpush1.bf16.msra.mxu0 %v380
    %969 = vmatprep.subr.bf16.mxu0 0
    %970 = vmatpush1.bf16.msra.mxu0 %v379
    %971 = vmatprep.subr.bf16.mxu0 0
    %972 = vmatpush2.bf16.msra.mxu0 0
    %973 = vmatprep.subr.bf16.mxu0 0
    %974 = vmatpush2.bf16.msra.mxu0 0
    %975 = vmatprep.subr.bf16.mxu0 0
    %976 = vmatpush2.bf16.msra.mxu0 0
    %977 = vmatprep.subr.bf16.mxu0 0
    %978 = vmatpush2.bf16.msra.mxu0 0
    %979 = vmatprep.subr.bf16.mxu0 0
    %980 = vmatpush2.bf16.msra.mxu0 0
    %981 = vmatprep.subr.bf16.mxu0 0
    %982 = vmatpush2.bf16.msra.mxu0 0
    %983 = vmatprep.subr.bf16.mxu0 0
    %984 = vmatpush2.bf16.msra.mxu0 0
    %985 = vmatprep.subr.bf16.mxu0 0
    %986 = vmatpush2.bf16.msra.mxu0 0
    %987 = vmatprep.mubr.bf16.mxu0 0
    %988 = vmatmul.mubr.bf16.gmra.mxu0 %v954
    %v989 = vpop.f32.mrf.mxu0
    %v990 = vadd.f32 %v345, %v989
    %v991 = vpop.f32.mrf.mxu0
    %v992 = vpop.f32.mrf.mxu0
    %v993 = vpop.f32.mrf.mxu0
    %994 = vdwg.mxu0
    %v995 = vtanh.pop %v990
    %v996 = vmul.f32 %v995, 0.5
    %v997 = vadd.f32 %v996, 0.5
    %v998 = vsel %vm50, %v995, %v997
    %999 = vrot.lane.b32.xlu0 %v998, 64
    %v1000 = vpop.permute.xlu0 %999
    %v1001 = vmul.f32 %v998, %v1000
    %1002 = vrot.lane.b32.xlu0 %v1001, 32
    %v1003 = vpop.permute.xlu0 %1002
    %v1004 = vmul.f32 %v998, %v893
    %v1005 = vadd.f32 %v1004, %v1003
    %v1006 = vtanh.pop %v1005
    %v1007 = vmul.f32 %v1000, %v1006
    %v1008 = vpack.c.bf16 %v950, %v950
    %1009 = vmatprep.subr.bf16.mxu0 0
    %1010 = vmatpush1.bf16.msra.mxu0 %v274
    %1011 = vmatprep.subr.bf16.mxu0 0
    %1012 = vmatpush1.bf16.msra.mxu0 %v273
    %1013 = vmatprep.subr.bf16.mxu0 0
    %1014 = vmatpush1.bf16.msra.mxu0 %v272
    %1015 = vmatprep.subr.bf16.mxu0 0
    %1016 = vmatpush1.bf16.msra.mxu0 %v271
    %1017 = vmatprep.subr.bf16.mxu0 0
    %1018 = vmatpush1.bf16.msra.mxu0 %v270
    %1019 = vmatprep.subr.bf16.mxu0 0
    %1020 = vmatpush1.bf16.msra.mxu0 %v269
    %1021 = vmatprep.subr.bf16.mxu0 0
    %1022 = vmatpush1.bf16.msra.mxu0 %v268
    %1023 = vmatprep.subr.bf16.mxu0 0
    %1024 = vmatpush1.bf16.msra.mxu0 %v267
    %1025 = vmatprep.subr.bf16.mxu0 0
    %1026 = vmatpush2.bf16.msra.mxu0 0
    %1027 = vmatprep.subr.bf16.mxu0 0
    %1028 = vmatpush2.bf16.msra.mxu0 0
    %1029 = vmatprep.subr.bf16.mxu0 0
    %1030 = vmatpush2.bf16.msra.mxu0 0
    %1031 = vmatprep.subr.bf16.mxu0 0
    %1032 = vmatpush2.bf16.msra.mxu0 0
    %1033 = vmatprep.subr.bf16.mxu0 0
    %1034 = vmatpush2.bf16.msra.mxu0 0
    %1035 = vmatprep.subr.bf16.mxu0 0
    %1036 = vmatpush2.bf16.msra.mxu0 0
    %1037 = vmatprep.subr.bf16.mxu0 0
    %1038 = vmatpush2.bf16.msra.mxu0 0
    %1039 = vmatprep.subr.bf16.mxu0 0
    %1040 = vmatpush2.bf16.msra.mxu0 0
    %1041 = vmatprep.mubr.bf16.mxu0 0
    %1042 = vmatmul.mubr.bf16.gmra.mxu0 %v1008
    %v1043 = vpop.f32.mrf.mxu0
    %v1044 = vadd.f32 0.0, %v1043
    %v1045 = vpop.f32.mrf.mxu0
    %v1046 = vpop.f32.mrf.mxu0
    %v1047 = vpop.f32.mrf.mxu0
    %1048 = vdwg.mxu0
    %v1049 = vadd.f32 %v227, %v1044
    %v1050 = vtanh.pop %v1049
    %v1051 = vmul.f32 %v1050, 0.5
    %v1052 = vadd.f32 %v1051, 0.5
    %v1053 = vsel %vm50, %v1050, %v1052
    %1054 = vrot.lane.b32.xlu0 %v1053, 64
    %v1055 = vpop.permute.xlu0 %1054
    %v1056 = vmul.f32 %v1053, %v1055
    %1057 = vrot.lane.b32.xlu0 %v1056, 32
    %v1058 = vpop.permute.xlu0 %1057
    %v1059 = vmul.f32 %v1053, %v948
    %v1060 = vadd.f32 %v1059, %v1058
    %v1061 = vtanh.pop %v1060
    %v1062 = vmul.f32 %v1055, %v1061
    %1063 = vrot.lane.b32.xlu0 %v1062, 64
    %v1064 = vpop.permute.xlu0 %1063
    %v1065 = vsel %vm51, %v1064, %v1007
    %v1066 = vpack.c.bf16 %v1065, %v1065
    %1067 = vmatprep.subr.bf16.mxu0 0
    %1068 = vmatpush1.bf16.msra.mxu0 %v386
    %1069 = vmatprep.subr.bf16.mxu0 0
    %1070 = vmatpush1.bf16.msra.mxu0 %v385
    %1071 = vmatprep.subr.bf16.mxu0 0
    %1072 = vmatpush1.bf16.msra.mxu0 %v384
    %1073 = vmatprep.subr.bf16.mxu0 0
    %1074 = vmatpush1.bf16.msra.mxu0 %v383
    %1075 = vmatprep.subr.bf16.mxu0 0
    %1076 = vmatpush1.bf16.msra.mxu0 %v382
    %1077 = vmatprep.subr.bf16.mxu0 0
    %1078 = vmatpush1.bf16.msra.mxu0 %v381
    %1079 = vmatprep.subr.bf16.mxu0 0
    %1080 = vmatpush1.bf16.msra.mxu0 %v380
    %1081 = vmatprep.subr.bf16.mxu0 0
    %1082 = vmatpush1.bf16.msra.mxu0 %v379
    %1083 = vmatprep.subr.bf16.mxu0 0
    %1084 = vmatpush2.bf16.msra.mxu0 0
    %1085 = vmatprep.subr.bf16.mxu0 0
    %1086 = vmatpush2.bf16.msra.mxu0 0
    %1087 = vmatprep.subr.bf16.mxu0 0
    %1088 = vmatpush2.bf16.msra.mxu0 0
    %1089 = vmatprep.subr.bf16.mxu0 0
    %1090 = vmatpush2.bf16.msra.mxu0 0
    %1091 = vmatprep.subr.bf16.mxu0 0
    %1092 = vmatpush2.bf16.msra.mxu0 0
    %1093 = vmatprep.subr.bf16.mxu0 0
    %1094 = vmatpush2.bf16.msra.mxu0 0
    %1095 = vmatprep.subr.bf16.mxu0 0
    %1096 = vmatpush2.bf16.msra.mxu0 0
    %1097 = vmatprep.subr.bf16.mxu0 0
    %1098 = vmatpush2.bf16.msra.mxu0 0
    %1099 = vmatprep.mubr.bf16.mxu0 0
    %1100 = vmatmul.mubr.bf16.gmra.mxu0 %v1066
    %v1101 = vpop.f32.mrf.mxu0
    %v1102 = vadd.f32 %v345, %v1101
    %v1103 = vpop.f32.mrf.mxu0
    %v1104 = vpop.f32.mrf.mxu0
    %v1105 = vpop.f32.mrf.mxu0
    %1106 = vdwg.mxu0
    %v1107 = vtanh.pop %v1102
    %v1108 = vmul.f32 %v1107, 0.5
    %v1109 = vadd.f32 %v1108, 0.5
    %v1110 = vsel %vm50, %v1107, %v1109
    %1111 = vrot.lane.b32.xlu0 %v1110, 64
    %v1112 = vpop.permute.xlu0 %1111
    %v1113 = vmul.f32 %v1110, %v1112
    %1114 = vrot.lane.b32.xlu0 %v1113, 32
    %v1115 = vpop.permute.xlu0 %1114
    %v1116 = vmul.f32 %v1110, %v1005
    %v1117 = vadd.f32 %v1116, %v1115
    %v1118 = vtanh.pop %v1117
    %v1119 = vmul.f32 %v1112, %v1118
    %v1120 = vpack.c.bf16 %v1062, %v1062
    %1121 = vmatprep.subr.bf16.mxu0 0
    %1122 = vmatpush1.bf16.msra.mxu0 %v274
    %1123 = vmatprep.subr.bf16.mxu0 0
    %1124 = vmatpush1.bf16.msra.mxu0 %v273
    %1125 = vmatprep.subr.bf16.mxu0 0
    %1126 = vmatpush1.bf16.msra.mxu0 %v272
    %1127 = vmatprep.subr.bf16.mxu0 0
    %1128 = vmatpush1.bf16.msra.mxu0 %v271
    %1129 = vmatprep.subr.bf16.mxu0 0
    %1130 = vmatpush1.bf16.msra.mxu0 %v270
    %1131 = vmatprep.subr.bf16.mxu0 0
    %1132 = vmatpush1.bf16.msra.mxu0 %v269
    %1133 = vmatprep.subr.bf16.mxu0 0
    %1134 = vmatpush1.bf16.msra.mxu0 %v268
    %1135 = vmatprep.subr.bf16.mxu0 0
    %1136 = vmatpush1.bf16.msra.mxu0 %v267
    %1137 = vmatprep.subr.bf16.mxu0 0
    %1138 = vmatpush2.bf16.msra.mxu0 0
    %1139 = vmatprep.subr.bf16.mxu0 0
    %1140 = vmatpush2.bf16.msra.mxu0 0
    %1141 = vmatprep.subr.bf16.mxu0 0
    %1142 = vmatpush2.bf16.msra.mxu0 0
    %1143 = vmatprep.subr.bf16.mxu0 0
    %1144 = vmatpush2.bf16.msra.mxu0 0
    %1145 = vmatprep.subr.bf16.mxu0 0
    %1146 = vmatpush2.bf16.msra.mxu0 0
    %1147 = vmatprep.subr.bf16.mxu0 0
    %1148 = vmatpush2.bf16.msra.mxu0 0
    %1149 = vmatprep.subr.bf16.mxu0 0
    %1150 = vmatpush2.bf16.msra.mxu0 0
    %1151 = vmatprep.subr.bf16.mxu0 0
    %1152 = vmatpush2.bf16.msra.mxu0 0
    %1153 = vmatprep.mubr.bf16.mxu0 0
    %1154 = vmatmul.mubr.bf16.gmra.mxu0 %v1120
    %v1155 = vpop.f32.mrf.mxu0
    %v1156 = vadd.f32 0.0, %v1155
    %v1157 = vpop.f32.mrf.mxu0
    %v1158 = vpop.f32.mrf.mxu0
    %v1159 = vpop.f32.mrf.mxu0
    %1160 = vdwg.mxu0
    %v1161 = vadd.f32 %v232, %v1156
    %v1162 = vtanh.pop %v1161
    %v1163 = vmul.f32 %v1162, 0.5
    %v1164 = vadd.f32 %v1163, 0.5
    %v1165 = vsel %vm50, %v1162, %v1164
    %1166 = vrot.lane.b32.xlu0 %v1165, 64
    %v1167 = vpop.permute.xlu0 %1166
    %v1168 = vmul.f32 %v1165, %v1167
    %1169 = vrot.lane.b32.xlu0 %v1168, 32
    %v1170 = vpop.permute.xlu0 %1169
    %v1171 = vmul.f32 %v1165, %v1060
    %v1172 = vadd.f32 %v1171, %v1170
    %v1173 = vtanh.pop %v1172
    %v1174 = vmul.f32 %v1167, %v1173
    %1175 = vrot.lane.b32.xlu0 %v1174, 64
    %v1176 = vpop.permute.xlu0 %1175
    %v1177 = vsel %vm51, %v1176, %v1119
    %v1178 = vpack.c.bf16 %v1177, %v1177
    %1179 = vmatprep.subr.bf16.mxu0 0
    %1180 = vmatpush1.bf16.msra.mxu0 %v386
    %1181 = vmatprep.subr.bf16.mxu0 0
    %1182 = vmatpush1.bf16.msra.mxu0 %v385
    %1183 = vmatprep.subr.bf16.mxu0 0
    %1184 = vmatpush1.bf16.msra.mxu0 %v384
    %1185 = vmatprep.subr.bf16.mxu0 0
    %1186 = vmatpush1.bf16.msra.mxu0 %v383
    %1187 = vmatprep.subr.bf16.mxu0 0
    %1188 = vmatpush1.bf16.msra.mxu0 %v382
    %1189 = vmatprep.subr.bf16.mxu0 0
    %1190 = vmatpush1.bf16.msra.mxu0 %v381
    %1191 = vmatprep.subr.bf16.mxu0 0
    %1192 = vmatpush1.bf16.msra.mxu0 %v380
    %1193 = vmatprep.subr.bf16.mxu0 0
    %1194 = vmatpush1.bf16.msra.mxu0 %v379
    %1195 = vmatprep.subr.bf16.mxu0 0
    %1196 = vmatpush2.bf16.msra.mxu0 0
    %1197 = vmatprep.subr.bf16.mxu0 0
    %1198 = vmatpush2.bf16.msra.mxu0 0
    %1199 = vmatprep.subr.bf16.mxu0 0
    %1200 = vmatpush2.bf16.msra.mxu0 0
    %1201 = vmatprep.subr.bf16.mxu0 0
    %1202 = vmatpush2.bf16.msra.mxu0 0
    %1203 = vmatprep.subr.bf16.mxu0 0
    %1204 = vmatpush2.bf16.msra.mxu0 0
    %1205 = vmatprep.subr.bf16.mxu0 0
    %1206 = vmatpush2.bf16.msra.mxu0 0
    %1207 = vmatprep.subr.bf16.mxu0 0
    %1208 = vmatpush2.bf16.msra.mxu0 0
    %1209 = vmatprep.subr.bf16.mxu0 0
    %1210 = vmatpush2.bf16.msra.mxu0 0
    %1211 = vmatprep.mubr.bf16.mxu0 0
    %1212 = vmatmul.mubr.bf16.gmra.mxu0 %v1178
    %v1213 = vpop.f32.mrf.mxu0
    %v1214 = vadd.f32 %v345, %v1213
    %v1215 = vpop.f32.mrf.mxu0
    %v1216 = vpop.f32.mrf.mxu0
    %v1217 = vpop.f32.mrf.mxu0
    %1218 = vdwg.mxu0
    %v1219 = vtanh.pop %v1214
    %v1220 = vmul.f32 %v1219, 0.5
    %v1221 = vadd.f32 %v1220, 0.5
    %v1222 = vsel %vm50, %v1219, %v1221
    %1223 = vrot.lane.b32.xlu0 %v1222, 64
    %v1224 = vpop.permute.xlu0 %1223
    %v1225 = vmul.f32 %v1222, %v1224
    %1226 = vrot.lane.b32.xlu0 %v1225, 32
    %v1227 = vpop.permute.xlu0 %1226
    %v1228 = vmul.f32 %v1222, %v1117
    %v1229 = vadd.f32 %v1228, %v1227
    %v1230 = vtanh.pop %v1229
    %v1231 = vmul.f32 %v1224, %v1230
    %v1232 = vld [vmem:[%s6] sm:$0x1]
    %v1234 = vlaneseq
    %v1235 = vshrl.u32 %v1234, 7
    %v1236 = vsub.s32 0, %v1235
    %v1237 = vrot.slane %v1232, %v1236
    %v1239 = vmul.f32 %v1231, %v1237
    %1240 = vadd.xlane.f32.xlu0 %v1239
    %v1241 = vpop.xlane.xlu0 %1240
    %v1242 = vld [vmem:[#allocation2] sm:$0x1]
    %v1244 = vlaneseq
    %v1245 = vshrl.u32 %v1244, 7
    %v1246 = vsub.s32 0, %v1245
    %v1247 = vrot.slane %v1242, %v1246
    %v1249 = vadd.f32 %v1241, %v1247
    %vm1250 = vcmask 7168
    %1251 = vst.msk [vmem:[%s8] sm:$0xff] %vm1250, %v1249
    // Predicated region
    $region38: #{tpu_custom_call.1} parent=1 // pred_check
      _
    $region39: #{tpu_custom_call.1} parent=1 // pred_check_branch
      %1253 = sbr.rel (0) target = $region41
    $region40: #{tpu_custom_call.1} parent=1 // pred_region
      _
    $region41: #{tpu_custom_call.1} parent=1 // pred_fallthru
      _
    // Predicated region
    $region42: #{tpu_custom_call.1} parent=1 // pred_check
      _
    $region43: #{tpu_custom_call.1} parent=1 // pred_check_branch
      %1255 = sbr.rel (0) target = $region45
    $region44: #{tpu_custom_call.1} parent=1 // pred_region
      _
    $region45: #{tpu_custom_call.1} parent=1 // pred_fallthru
      _
    %1256 = vsyncpa [#allocation4], 1

</llo_original>
